<compile_context>
chip_gen: v6e
topology: v6e:2x2x1
jax: 0.10.0
libtpu: 0.0.40
codegen_flags: <defaults>
</compile_context>

<pallas_src>
import functools

import jax
import jax.numpy as jnp
from jax.experimental import pallas as pl
from jax.experimental.pallas import tpu as pltpu

LEAKY_SLOPE = 0.01   # nn.LeakyReLU default
BN_EPS = 1e-5        # nn.BatchNorm1d default


def _leaky(h):
    return jnp.where(h > 0, h, LEAKY_SLOPE * h)


def _bn_cols(y, gamma, beta):
    """BatchNorm1d training-mode forward; y is (features, rows), stats over rows."""
    mean = jnp.mean(y, axis=1, keepdims=True)
    var = jnp.mean((y - mean) * (y - mean), axis=1, keepdims=True)
    scale = gamma * jax.lax.rsqrt(var + BN_EPS)
    return y * scale + (beta - mean * scale)


def _masked_bn_cols(y, mask, count, gamma, beta):
    """BatchNorm1d over the columns where mask == 1 (count of them is static).

    Columns with mask == 0 are excluded from the statistics and zeroed in the
    output (they correspond to PyTorch's zero_pad rows in the aggregation)."""
    inv_count = 1.0 / count
    mean = jnp.sum(y * mask, axis=1, keepdims=True) * inv_count
    diff = y - mean
    var = jnp.sum(diff * diff * mask, axis=1, keepdims=True) * inv_count
    scale = gamma * jax.lax.rsqrt(var + BN_EPS)
    return (y * scale + (beta - mean * scale)) * mask


# ---------------------------------------------------------------------------
# Fused GraphNetLayer kernel (rows-on-lanes layout)
# ---------------------------------------------------------------------------
def _graphnet_kernel(xT_ref, p32_ref, p4_ref, o_ref, *, T, n_in, n_out, h_dim):
    rows = xT_ref.shape[1]                       # N*T (static)
    n_edge = float(rows - rows // T)             # N*(T-1) real edges per direction

    xT = xT_ref[...]                             # (n_in, rows): rows on lanes
    p32 = p32_ref[...]                           # packed 32-sublane parameters
    p4 = p4_ref[...]                             # packed n_out-sublane parameters

    # ---- static unpack of the two packed parameter slabs ----------------------
    c = 0
    w1aT = p32[:, c:c + n_in]; c += n_in         # edge W1, dst-feature part
    w1bT = p32[:, c:c + n_in]; c += n_in         # edge W1, src-feature part
    w1d = p32[:, c:c + 1]; c += 1                # edge W1, direction column
    b1e = p32[:, c:c + 1]; c += 1
    w2eT = p32[:, c:c + h_dim]; c += h_dim
    b2e = p32[:, c:c + 1]; c += 1
    w1nT = p32[:, c:c + n_out]; c += n_out       # node W1
    b1n = p32[:, c:c + 1]; c += 1
    w2nT = p32[:, c:c + h_dim]; c += h_dim
    b2n = p32[:, c:c + 1]; c += 1

    c = 0
    w3eT = p4[:, c:c + h_dim]; c += h_dim
    b3e = p4[:, c:c + 1]; c += 1
    g_e = p4[:, c:c + 1]; c += 1                 # edge BN gamma
    b_e = p4[:, c:c + 1]; c += 1                 # edge BN beta
    w3nT = p4[:, c:c + h_dim]; c += h_dim
    b3n = p4[:, c:c + 1]; c += 1
    g_n = p4[:, c:c + 1]; c += 1                 # node BN gamma
    b_n = p4[:, c:c + 1]; c += 1                 # node BN beta

    def dotf(a, b):
        return jnp.dot(a, b, preferred_element_type=jnp.float32)

    # ---- edge-validity masks from the row index (no DMA'd mask arrays) --------
    t = jax.lax.broadcasted_iota(jnp.int32, (1, rows), 1) % T
    m_fw = (t != 0).astype(jnp.float32)          # a forward edge exists at t > 0
    m_bw = (t != T - 1).astype(jnp.float32)      # a backward edge exists at t < T-1

    # ---- edge_fn layer 1: shared partial products + in-kernel neighbour shift -
    xa = dotf(w1aT, xT)                          # (h_dim, rows)
    xb = dotf(w1bT, xT)                          # (h_dim, rows)
    # Rotate xb along the row axis to get the t-1 / t+1 neighbour products.
    # The wrapped columns land on t==0 (fwd) / t==T-1 (bwd) rows, which the
    # masked BatchNorm below excludes from stats and zeroes in the output.
    xb_prev = jnp.concatenate([xb[:, rows - 1:], xb[:, :rows - 1]], axis=1)
    xb_next = jnp.concatenate([xb[:, 1:], xb[:, :1]], axis=1)
    h_in = _leaky(xa + xb + b1e)                 # direction = 0
    h_fw = _leaky(xa + xb_prev + w1d + b1e)      # direction = +1
    h_bw = _leaky(xa + xb_next - w1d + b1e)      # direction = -1

    # ---- edge_fn layers 2-3: three narrow streams (no axis-0 concat copy) -----
    def edge_tail(hh):
        g = _leaky(dotf(w2eT, hh) + b2e)
        return dotf(w3eT, g) + b3e               # (n_out, rows)

    # per-call BatchNorm1d (each edge_fn call keeps its OWN batch statistics)
    y_in = _bn_cols(edge_tail(h_in), g_e, b_e)
    y_fw = _masked_bn_cols(edge_tail(h_fw), m_fw, n_edge, g_e, b_e)
    y_bw = _masked_bn_cols(edge_tail(h_bw), m_bw, n_edge, g_e, b_e)

    # ---- node aggregation: masked rows are exactly PyTorch's zero_pad rows ----
    node_in = y_in + y_fw + y_bw                 # (n_out, rows)

    # ---- node_fn MLP + BatchNorm1d ---------------------------------------------
    hn = _leaky(dotf(w1nT, node_in) + b1n)
    hn = _leaky(dotf(w2nT, hn) + b2n)
    yn = dotf(w3nT, hn) + b3n
    o_ref[...] = _bn_cols(yn, g_n, b_n)


# ---------------------------------------------------------------------------
# Wrapper: layout plumbing (transpose + parameter packing) in plain JAX
# ---------------------------------------------------------------------------
def graph_net_layer(x, edge_params, node_params, n_in, n_out, h_dim=32):
    N, T, D = x.shape
    assert D == n_in
    rows = N * T

    w1e, b1e, w2e, b2e, w3e, b3e, ge, be = edge_params
    w1n, b1n, w2n, b2n, w3n, b3n, gn, bn = node_params

    # Split edge W1 (so cat([x_i, x_j, dir]) is never materialized) and move
    # every parameter to the rows-on-lanes layout (features first) host-side:
    #   cat([x_i, x_j, dir]) @ W1 == x_i @ W1[:n] + x_j @ W1[n:2n] + dir * W1[2n]
    pack32 = jnp.concatenate(
        [w1e[:n_in].T, w1e[n_in:2 * n_in].T, w1e[2 * n_in:].T, b1e.T,
         w2e.T, b2e.T,
         w1n.T, b1n.T, w2n.T, b2n.T], axis=1)          # (h_dim, 2*n_in + n_out + 2*h + 6)
    pack_o = jnp.concatenate(
        [w3e.T, b3e.T, ge.T, be.T,
         w3n.T, b3n.T, gn.T, bn.T], axis=1)            # (n_out, 2*h + 6)

    x_t = x.reshape(rows, n_in).T                      # (n_in, rows) -- rows on lanes

    kernel = functools.partial(_graphnet_kernel, T=T, n_in=n_in, n_out=n_out,
                               h_dim=h_dim)
    vmem = pl.BlockSpec(memory_space=pltpu.MemorySpace.VMEM)

    # VMEM budget from the actual live set (~8 (h,rows) + ~6 (n_out,rows) f32
    # activations + packed params) with slack, capped under v7x's 32 MiB scoped
    # default.  Larger N*T belongs to the tiled-grid TODO at the top of file.
    per_row = 4 * (8 * h_dim + 6 * n_out + 2 * n_in)
    vmem_bytes = int(min(max(rows * per_row + (2 << 20), 4 << 20), 30 << 20))

    out_t = pl.pallas_call(
        kernel,
        out_shape=jax.ShapeDtypeStruct((n_out, rows), jnp.float32),
        in_specs=[vmem, vmem, vmem],
        out_specs=vmem,
        compiler_params=pltpu.CompilerParams(vmem_limit_bytes=vmem_bytes),
    )(x_t, pack32, pack_o)

    # Layout plumbing back to (N, T, n_out); cheap XLA transpose outside kernel.
    return out_t.T.reshape(N, T, n_out)


# ---------------------------------------------------------------------------
# Deterministic parameter init (PyTorch Linear-style uniform bounds)
# ---------------------------------------------------------------------------
def init_feedforward(key, d_in, d_out, h_dims=(32, 32)):
    dims = [d_in] + list(h_dims) + [d_out]
    params = []
    for i in range(len(dims) - 1):
        key, kw, kb = jax.random.split(key, 3)
        bound = 1.0 / float(dims[i]) ** 0.5
        w = jax.random.uniform(kw, (dims[i], dims[i + 1]), jnp.float32, -bound, bound)
        b = jax.random.uniform(kb, (1, dims[i + 1]), jnp.float32, -bound, bound)
        params += [w, b]
    gamma = jnp.ones((1, d_out), jnp.float32)    # BatchNorm1d weight init
    beta = jnp.zeros((1, d_out), jnp.float32)    # BatchNorm1d bias init
    params += [gamma, beta]
    return tuple(params), key


# ---------------------------------------------------------------------------
# Pure-JAX reference mirroring the PyTorch module (numeric sanity check)
# ---------------------------------------------------------------------------
def _reference_forward(x, edge_params, node_params, n_in, n_out):
    def ff_bn_ref(z, params):
        w1, b1, w2, b2, w3, b3, g, b = params
        h = _leaky(z @ w1 + b1)
        h = _leaky(h @ w2 + b2)
        y = h @ w3 + b3
        m = jnp.mean(y, axis=0, keepdims=True)
        v = jnp.mean((y - m) ** 2, axis=0, keepdims=True)
        return (y - m) * jax.lax.rsqrt(v + BN_EPS) * g + b

    N, T, _ = x.shape
    ein = 2 * n_in + 1
    ones_dir = jnp.ones((N, T - 1, 1), x.dtype)
    zeros_dir = jnp.zeros((N, T, 1), x.dtype)
    inp = jnp.concatenate([x, x, zeros_dir], 2).reshape(N * T, ein)
    fwd = jnp.concatenate([x[:, 1:], x[:, :-1], ones_dir], 2).reshape(N * (T - 1), ein)
    bwd = jnp.concatenate([x[:, :-1], x[:, 1:], -ones_dir], 2).reshape(N * (T - 1), ein)
    o_in = ff_bn_ref(inp, edge_params).reshape(N, T, n_out)
    o_fw = ff_bn_ref(fwd, edge_params).reshape(N, T - 1, n_out)
    o_bw = ff_bn_ref(bwd, edge_params).reshape(N, T - 1, n_out)
    zp = jnp.zeros((N, 1, n_out), jnp.float32)
    node_in = (o_in + jnp.concatenate([zp, o_fw], 1)
               + jnp.concatenate([o_bw, zp], 1)).reshape(N * T, n_out)
    return ff_bn_ref(node_in, node_params).reshape(N, T, n_out)


if __name__ == "__main__":
    N, T, n_in, n_out = 2, 8, 4, 4
    edge_fn_in = 2 * n_in + 1          # 9
    node_fn_in = n_out                 # 4

    key = jax.random.PRNGKey(0)
    edge_params, key = init_feedforward(key, edge_fn_in, n_out, h_dims=(32, 32))
    node_params, key = init_feedforward(key, node_fn_in, n_out, h_dims=(32, 32))

    key, kx = jax.random.split(key)
    x = jax.random.normal(kx, (N, T, n_in), jnp.float32)

    fwd = jax.jit(lambda xx: graph_net_layer(xx, edge_params, node_params, n_in, n_out))
    out = jax.block_until_ready(fwd(x))

    ref = _reference_forward(x, edge_params, node_params, n_in, n_out)

    assert out.shape == (N, T, n_out)
    assert bool(jnp.all(jnp.isfinite(out)))
    assert bool(jnp.allclose(out, ref, atol=2e-3, rtol=2e-3)), "mismatch vs reference"
    print("KERNEL_OK")
</pallas_src>

<mosaic_0001>
module attributes {stable_mosaic.version = 11 : i64} {
  func.func @_graphnet_kernel(%arg0: memref<4x16xf32, #tpu.memory_space<vmem>>, %arg1: memref<32x81xf32, #tpu.memory_space<vmem>>, %arg2: memref<4x70xf32, #tpu.memory_space<vmem>>, %arg3: memref<4x16xf32, #tpu.memory_space<vmem>>) attributes {dimension_semantics = [], scalar_prefetch = 0 : i64, scratch_operands = 0 : i64, tpu.core_type = #tpu.core_type<tc>} {
    %c0 = arith.constant 0 : index
    %c0_0 = arith.constant 0 : index
    %0 = vector.load %arg0[%c0, %c0_0] : memref<4x16xf32, #tpu.memory_space<vmem>>, vector<4x16xf32>
    %c0_1 = arith.constant 0 : index
    %c0_2 = arith.constant 0 : index
    %1 = vector.load %arg1[%c0_1, %c0_2] : memref<32x81xf32, #tpu.memory_space<vmem>>, vector<32x81xf32>
    %c0_3 = arith.constant 0 : index
    %c0_4 = arith.constant 0 : index
    %2 = vector.load %arg2[%c0_3, %c0_4] : memref<4x70xf32, #tpu.memory_space<vmem>>, vector<4x70xf32>
    %3 = vector.extract_strided_slice %1 {offsets = [0, 0], sizes = [32, 4], strides = [1, 1]} : vector<32x81xf32> to vector<32x4xf32>
    %4 = vector.extract_strided_slice %1 {offsets = [0, 4], sizes = [32, 4], strides = [1, 1]} : vector<32x81xf32> to vector<32x4xf32>
    %5 = vector.extract_strided_slice %1 {offsets = [0, 8], sizes = [32, 1], strides = [1, 1]} : vector<32x81xf32> to vector<32x1xf32>
    %6 = vector.extract_strided_slice %1 {offsets = [0, 9], sizes = [32, 1], strides = [1, 1]} : vector<32x81xf32> to vector<32x1xf32>
    %7 = vector.extract_strided_slice %1 {offsets = [0, 10], sizes = [32, 32], strides = [1, 1]} : vector<32x81xf32> to vector<32x32xf32>
    %8 = vector.extract_strided_slice %1 {offsets = [0, 42], sizes = [32, 1], strides = [1, 1]} : vector<32x81xf32> to vector<32x1xf32>
    %9 = vector.extract_strided_slice %1 {offsets = [0, 43], sizes = [32, 4], strides = [1, 1]} : vector<32x81xf32> to vector<32x4xf32>
    %10 = vector.extract_strided_slice %1 {offsets = [0, 47], sizes = [32, 1], strides = [1, 1]} : vector<32x81xf32> to vector<32x1xf32>
    %11 = vector.extract_strided_slice %1 {offsets = [0, 48], sizes = [32, 32], strides = [1, 1]} : vector<32x81xf32> to vector<32x32xf32>
    %12 = vector.extract_strided_slice %1 {offsets = [0, 80], sizes = [32, 1], strides = [1, 1]} : vector<32x81xf32> to vector<32x1xf32>
    %13 = vector.extract_strided_slice %2 {offsets = [0, 0], sizes = [4, 32], strides = [1, 1]} : vector<4x70xf32> to vector<4x32xf32>
    %14 = vector.extract_strided_slice %2 {offsets = [0, 32], sizes = [4, 1], strides = [1, 1]} : vector<4x70xf32> to vector<4x1xf32>
    %15 = vector.extract_strided_slice %2 {offsets = [0, 33], sizes = [4, 1], strides = [1, 1]} : vector<4x70xf32> to vector<4x1xf32>
    %16 = vector.extract_strided_slice %2 {offsets = [0, 34], sizes = [4, 1], strides = [1, 1]} : vector<4x70xf32> to vector<4x1xf32>
    %17 = vector.extract_strided_slice %2 {offsets = [0, 35], sizes = [4, 32], strides = [1, 1]} : vector<4x70xf32> to vector<4x32xf32>
    %18 = vector.extract_strided_slice %2 {offsets = [0, 67], sizes = [4, 1], strides = [1, 1]} : vector<4x70xf32> to vector<4x1xf32>
    %19 = vector.extract_strided_slice %2 {offsets = [0, 68], sizes = [4, 1], strides = [1, 1]} : vector<4x70xf32> to vector<4x1xf32>
    %20 = vector.extract_strided_slice %2 {offsets = [0, 69], sizes = [4, 1], strides = [1, 1]} : vector<4x70xf32> to vector<4x1xf32>
    %21 = tpu.iota {dimensions = array<i32: 1>} : vector<1x16xi32>
    %c8_i32 = arith.constant 8 : i32
    %c0_i32 = arith.constant 0 : i32
    %22 = arith.cmpi eq, %c8_i32, %c0_i32 : i32
    %c1_i32 = arith.constant 1 : i32
    %23 = arith.select %22, %c1_i32, %c8_i32 : i32
    %24 = vector.broadcast %23 : i32 to vector<1x16xi32>
    %25 = arith.remsi %21, %24 : vector<1x16xi32>
    %c0_i32_5 = arith.constant 0 : i32
    %26 = vector.broadcast %c0_i32_5 : i32 to vector<1x16xi32>
    %27 = arith.cmpi ne, %25, %26 : vector<1x16xi32>
    %c0_i32_6 = arith.constant 0 : i32
    %28 = vector.broadcast %c0_i32_6 : i32 to vector<1x16xi32>
    %29 = arith.cmpi slt, %25, %28 : vector<1x16xi32>
    %c0_i32_7 = arith.constant 0 : i32
    %30 = arith.cmpi slt, %23, %c0_i32_7 : i32
    %31 = vector.broadcast %30 : i1 to vector<1x16xi1>
    %32 = vector.broadcast %31 : vector<1x16xi1> to vector<1x16xi1>
    %33 = arith.xori %29, %32 : vector<1x16xi1>
    %34 = arith.andi %33, %27 : vector<1x16xi1>
    %35 = vector.broadcast %23 : i32 to vector<1x16xi32>
    %36 = arith.addi %25, %35 : vector<1x16xi32>
    %37 = arith.select %34, %36, %25 : vector<1x16xi1>, vector<1x16xi32>
    %c0_i32_8 = arith.constant 0 : i32
    %38 = vector.broadcast %c0_i32_8 : i32 to vector<1x16xi32>
    %39 = arith.cmpi ne, %37, %38 : vector<1x16xi32>
    %40 = arith.extui %39 : vector<1x16xi1> to vector<1x16xi32>
    %41 = arith.sitofp %40 : vector<1x16xi32> to vector<1x16xf32>
    %c7_i32 = arith.constant 7 : i32
    %42 = vector.broadcast %c7_i32 : i32 to vector<1x16xi32>
    %43 = arith.cmpi ne, %37, %42 : vector<1x16xi32>
    %44 = arith.extui %43 : vector<1x16xi1> to vector<1x16xi32>
    %45 = arith.sitofp %44 : vector<1x16xi32> to vector<1x16xf32>
    %cst = arith.constant dense<0.000000e+00> : vector<32x16xf32>
    %46 = tpu.matmul %3, %0, %cst {dimension_numbers = #tpu.dot_dimension_numbers<[1], [0], [0], [1], [0, 0, 1, 1], [], []>} : vector<32x4xf32>, vector<4x16xf32>, vector<32x16xf32> -> vector<32x16xf32>
    %cst_9 = arith.constant dense<0.000000e+00> : vector<32x16xf32>
    %47 = tpu.matmul %4, %0, %cst_9 {dimension_numbers = #tpu.dot_dimension_numbers<[1], [0], [0], [1], [0, 0, 1, 1], [], []>} : vector<32x4xf32>, vector<4x16xf32>, vector<32x16xf32> -> vector<32x16xf32>
    %48 = vector.extract_strided_slice %47 {offsets = [0, 15], sizes = [32, 1], strides = [1, 1]} : vector<32x16xf32> to vector<32x1xf32>
    %49 = vector.extract_strided_slice %47 {offsets = [0, 0], sizes = [32, 15], strides = [1, 1]} : vector<32x16xf32> to vector<32x15xf32>
    %50 = tpu.concatenate %48, %49 in 1 : vector<32x1xf32>, vector<32x15xf32> -> vector<32x16xf32>
    %51 = vector.extract_strided_slice %47 {offsets = [0, 1], sizes = [32, 15], strides = [1, 1]} : vector<32x16xf32> to vector<32x15xf32>
    %52 = vector.extract_strided_slice %47 {offsets = [0, 0], sizes = [32, 1], strides = [1, 1]} : vector<32x16xf32> to vector<32x1xf32>
    %53 = tpu.concatenate %51, %52 in 1 : vector<32x15xf32>, vector<32x1xf32> -> vector<32x16xf32>
    %54 = arith.addf %46, %47 : vector<32x16xf32>
    %55 = vector.broadcast %6 : vector<32x1xf32> to vector<32x16xf32>
    %56 = arith.addf %54, %55 : vector<32x16xf32>
    %cst_10 = arith.constant 0.000000e+00 : f32
    %57 = vector.broadcast %cst_10 : f32 to vector<32x16xf32>
    %58 = arith.cmpf ogt, %56, %57 : vector<32x16xf32>
    %cst_11 = arith.constant 0.00999999977 : f32
    %59 = vector.broadcast %cst_11 : f32 to vector<32x16xf32>
    %60 = arith.mulf %59, %56 : vector<32x16xf32>
    %61 = arith.select %58, %56, %60 : vector<32x16xi1>, vector<32x16xf32>
    %62 = arith.addf %46, %50 : vector<32x16xf32>
    %63 = vector.broadcast %5 : vector<32x1xf32> to vector<32x16xf32>
    %64 = arith.addf %62, %63 : vector<32x16xf32>
    %65 = vector.broadcast %6 : vector<32x1xf32> to vector<32x16xf32>
    %66 = arith.addf %64, %65 : vector<32x16xf32>
    %cst_12 = arith.constant 0.000000e+00 : f32
    %67 = vector.broadcast %cst_12 : f32 to vector<32x16xf32>
    %68 = arith.cmpf ogt, %66, %67 : vector<32x16xf32>
    %cst_13 = arith.constant 0.00999999977 : f32
    %69 = vector.broadcast %cst_13 : f32 to vector<32x16xf32>
    %70 = arith.mulf %69, %66 : vector<32x16xf32>
    %71 = arith.select %68, %66, %70 : vector<32x16xi1>, vector<32x16xf32>
    %72 = arith.addf %46, %53 : vector<32x16xf32>
    %73 = vector.broadcast %5 : vector<32x1xf32> to vector<32x16xf32>
    %74 = arith.subf %72, %73 : vector<32x16xf32>
    %75 = vector.broadcast %6 : vector<32x1xf32> to vector<32x16xf32>
    %76 = arith.addf %74, %75 : vector<32x16xf32>
    %cst_14 = arith.constant 0.000000e+00 : f32
    %77 = vector.broadcast %cst_14 : f32 to vector<32x16xf32>
    %78 = arith.cmpf ogt, %76, %77 : vector<32x16xf32>
    %cst_15 = arith.constant 0.00999999977 : f32
    %79 = vector.broadcast %cst_15 : f32 to vector<32x16xf32>
    %80 = arith.mulf %79, %76 : vector<32x16xf32>
    %81 = arith.select %78, %76, %80 : vector<32x16xi1>, vector<32x16xf32>
    %cst_16 = arith.constant dense<0.000000e+00> : vector<32x16xf32>
    %82 = tpu.matmul %7, %61, %cst_16 {dimension_numbers = #tpu.dot_dimension_numbers<[1], [0], [0], [1], [0, 0, 1, 1], [], []>} : vector<32x32xf32>, vector<32x16xf32>, vector<32x16xf32> -> vector<32x16xf32>
    %83 = vector.broadcast %8 : vector<32x1xf32> to vector<32x16xf32>
    %84 = arith.addf %82, %83 : vector<32x16xf32>
    %cst_17 = arith.constant 0.000000e+00 : f32
    %85 = vector.broadcast %cst_17 : f32 to vector<32x16xf32>
    %86 = arith.cmpf ogt, %84, %85 : vector<32x16xf32>
    %cst_18 = arith.constant 0.00999999977 : f32
    %87 = vector.broadcast %cst_18 : f32 to vector<32x16xf32>
    %88 = arith.mulf %87, %84 : vector<32x16xf32>
    %89 = arith.select %86, %84, %88 : vector<32x16xi1>, vector<32x16xf32>
    %cst_19 = arith.constant dense<0.000000e+00> : vector<4x16xf32>
    %90 = tpu.matmul %13, %89, %cst_19 {dimension_numbers = #tpu.dot_dimension_numbers<[1], [0], [0], [1], [0, 0, 1, 1], [], []>} : vector<4x32xf32>, vector<32x16xf32>, vector<4x16xf32> -> vector<4x16xf32>
    %91 = vector.broadcast %14 : vector<4x1xf32> to vector<4x16xf32>
    %92 = arith.addf %90, %91 : vector<4x16xf32>
    %cst_20 = arith.constant dense<0.000000e+00> : vector<4xf32>
    %93 = vector.multi_reduction <add>, %92, %cst_20 [1] : vector<4x16xf32> to vector<4xf32>
    %94 = vector.shape_cast %93 : vector<4xf32> to vector<4x1xf32>
    %cst_21 = arith.constant 1.600000e+01 : f32
    %95 = vector.broadcast %cst_21 : f32 to vector<4x1xf32>
    %96 = arith.divf %94, %95 : vector<4x1xf32>
    %97 = vector.broadcast %96 : vector<4x1xf32> to vector<4x16xf32>
    %98 = arith.subf %92, %97 : vector<4x16xf32>
    %99 = vector.broadcast %96 : vector<4x1xf32> to vector<4x16xf32>
    %100 = arith.subf %92, %99 : vector<4x16xf32>
    %101 = arith.mulf %98, %100 : vector<4x16xf32>
    %cst_22 = arith.constant dense<0.000000e+00> : vector<4xf32>
    %102 = vector.multi_reduction <add>, %101, %cst_22 [1] : vector<4x16xf32> to vector<4xf32>
    %103 = vector.shape_cast %102 : vector<4xf32> to vector<4x1xf32>
    %cst_23 = arith.constant 1.600000e+01 : f32
    %104 = vector.broadcast %cst_23 : f32 to vector<4x1xf32>
    %105 = arith.divf %103, %104 : vector<4x1xf32>
    %cst_24 = arith.constant 9.99999974E-6 : f32
    %106 = vector.broadcast %cst_24 : f32 to vector<4x1xf32>
    %107 = arith.addf %105, %106 : vector<4x1xf32>
    %108 = math.rsqrt %107 : vector<4x1xf32>
    %109 = arith.mulf %15, %108 : vector<4x1xf32>
    %110 = vector.broadcast %109 : vector<4x1xf32> to vector<4x16xf32>
    %111 = arith.mulf %92, %110 : vector<4x16xf32>
    %112 = arith.mulf %96, %109 : vector<4x1xf32>
    %113 = arith.subf %16, %112 : vector<4x1xf32>
    %114 = vector.broadcast %113 : vector<4x1xf32> to vector<4x16xf32>
    %115 = arith.addf %111, %114 : vector<4x16xf32>
    %cst_25 = arith.constant dense<0.000000e+00> : vector<32x16xf32>
    %116 = tpu.matmul %7, %71, %cst_25 {dimension_numbers = #tpu.dot_dimension_numbers<[1], [0], [0], [1], [0, 0, 1, 1], [], []>} : vector<32x32xf32>, vector<32x16xf32>, vector<32x16xf32> -> vector<32x16xf32>
    %117 = vector.broadcast %8 : vector<32x1xf32> to vector<32x16xf32>
    %118 = arith.addf %116, %117 : vector<32x16xf32>
    %cst_26 = arith.constant 0.000000e+00 : f32
    %119 = vector.broadcast %cst_26 : f32 to vector<32x16xf32>
    %120 = arith.cmpf ogt, %118, %119 : vector<32x16xf32>
    %cst_27 = arith.constant 0.00999999977 : f32
    %121 = vector.broadcast %cst_27 : f32 to vector<32x16xf32>
    %122 = arith.mulf %121, %118 : vector<32x16xf32>
    %123 = arith.select %120, %118, %122 : vector<32x16xi1>, vector<32x16xf32>
    %cst_28 = arith.constant dense<0.000000e+00> : vector<4x16xf32>
    %124 = tpu.matmul %13, %123, %cst_28 {dimension_numbers = #tpu.dot_dimension_numbers<[1], [0], [0], [1], [0, 0, 1, 1], [], []>} : vector<4x32xf32>, vector<32x16xf32>, vector<4x16xf32> -> vector<4x16xf32>
    %125 = vector.broadcast %14 : vector<4x1xf32> to vector<4x16xf32>
    %126 = arith.addf %124, %125 : vector<4x16xf32>
    %127 = vector.broadcast %41 : vector<1x16xf32> to vector<4x16xf32>
    %128 = arith.mulf %126, %127 : vector<4x16xf32>
    %cst_29 = arith.constant dense<0.000000e+00> : vector<4xf32>
    %129 = vector.multi_reduction <add>, %128, %cst_29 [1] : vector<4x16xf32> to vector<4xf32>
    %130 = vector.shape_cast %129 : vector<4xf32> to vector<4x1xf32>
    %cst_30 = arith.constant 0.0714285746 : f32
    %131 = vector.broadcast %cst_30 : f32 to vector<4x1xf32>
    %132 = arith.mulf %130, %131 : vector<4x1xf32>
    %133 = vector.broadcast %132 : vector<4x1xf32> to vector<4x16xf32>
    %134 = arith.subf %126, %133 : vector<4x16xf32>
    %135 = arith.mulf %134, %134 : vector<4x16xf32>
    %136 = vector.broadcast %41 : vector<1x16xf32> to vector<4x16xf32>
    %137 = arith.mulf %135, %136 : vector<4x16xf32>
    %cst_31 = arith.constant dense<0.000000e+00> : vector<4xf32>
    %138 = vector.multi_reduction <add>, %137, %cst_31 [1] : vector<4x16xf32> to vector<4xf32>
    %139 = vector.shape_cast %138 : vector<4xf32> to vector<4x1xf32>
    %cst_32 = arith.constant 0.0714285746 : f32
    %140 = vector.broadcast %cst_32 : f32 to vector<4x1xf32>
    %141 = arith.mulf %139, %140 : vector<4x1xf32>
    %cst_33 = arith.constant 9.99999974E-6 : f32
    %142 = vector.broadcast %cst_33 : f32 to vector<4x1xf32>
    %143 = arith.addf %141, %142 : vector<4x1xf32>
    %144 = math.rsqrt %143 : vector<4x1xf32>
    %145 = arith.mulf %15, %144 : vector<4x1xf32>
    %146 = vector.broadcast %145 : vector<4x1xf32> to vector<4x16xf32>
    %147 = arith.mulf %126, %146 : vector<4x16xf32>
    %148 = arith.mulf %132, %145 : vector<4x1xf32>
    %149 = arith.subf %16, %148 : vector<4x1xf32>
    %150 = vector.broadcast %149 : vector<4x1xf32> to vector<4x16xf32>
    %151 = arith.addf %147, %150 : vector<4x16xf32>
    %152 = vector.broadcast %41 : vector<1x16xf32> to vector<4x16xf32>
    %153 = arith.mulf %151, %152 : vector<4x16xf32>
    %cst_34 = arith.constant dense<0.000000e+00> : vector<32x16xf32>
    %154 = tpu.matmul %7, %81, %cst_34 {dimension_numbers = #tpu.dot_dimension_numbers<[1], [0], [0], [1], [0, 0, 1, 1], [], []>} : vector<32x32xf32>, vector<32x16xf32>, vector<32x16xf32> -> vector<32x16xf32>
    %155 = vector.broadcast %8 : vector<32x1xf32> to vector<32x16xf32>
    %156 = arith.addf %154, %155 : vector<32x16xf32>
    %cst_35 = arith.constant 0.000000e+00 : f32
    %157 = vector.broadcast %cst_35 : f32 to vector<32x16xf32>
    %158 = arith.cmpf ogt, %156, %157 : vector<32x16xf32>
    %cst_36 = arith.constant 0.00999999977 : f32
    %159 = vector.broadcast %cst_36 : f32 to vector<32x16xf32>
    %160 = arith.mulf %159, %156 : vector<32x16xf32>
    %161 = arith.select %158, %156, %160 : vector<32x16xi1>, vector<32x16xf32>
    %cst_37 = arith.constant dense<0.000000e+00> : vector<4x16xf32>
    %162 = tpu.matmul %13, %161, %cst_37 {dimension_numbers = #tpu.dot_dimension_numbers<[1], [0], [0], [1], [0, 0, 1, 1], [], []>} : vector<4x32xf32>, vector<32x16xf32>, vector<4x16xf32> -> vector<4x16xf32>
    %163 = vector.broadcast %14 : vector<4x1xf32> to vector<4x16xf32>
    %164 = arith.addf %162, %163 : vector<4x16xf32>
    %165 = vector.broadcast %45 : vector<1x16xf32> to vector<4x16xf32>
    %166 = arith.mulf %164, %165 : vector<4x16xf32>
    %cst_38 = arith.constant dense<0.000000e+00> : vector<4xf32>
    %167 = vector.multi_reduction <add>, %166, %cst_38 [1] : vector<4x16xf32> to vector<4xf32>
    %168 = vector.shape_cast %167 : vector<4xf32> to vector<4x1xf32>
    %cst_39 = arith.constant 0.0714285746 : f32
    %169 = vector.broadcast %cst_39 : f32 to vector<4x1xf32>
    %170 = arith.mulf %168, %169 : vector<4x1xf32>
    %171 = vector.broadcast %170 : vector<4x1xf32> to vector<4x16xf32>
    %172 = arith.subf %164, %171 : vector<4x16xf32>
    %173 = arith.mulf %172, %172 : vector<4x16xf32>
    %174 = vector.broadcast %45 : vector<1x16xf32> to vector<4x16xf32>
    %175 = arith.mulf %173, %174 : vector<4x16xf32>
    %cst_40 = arith.constant dense<0.000000e+00> : vector<4xf32>
    %176 = vector.multi_reduction <add>, %175, %cst_40 [1] : vector<4x16xf32> to vector<4xf32>
    %177 = vector.shape_cast %176 : vector<4xf32> to vector<4x1xf32>
    %cst_41 = arith.constant 0.0714285746 : f32
    %178 = vector.broadcast %cst_41 : f32 to vector<4x1xf32>
    %179 = arith.mulf %177, %178 : vector<4x1xf32>
    %cst_42 = arith.constant 9.99999974E-6 : f32
    %180 = vector.broadcast %cst_42 : f32 to vector<4x1xf32>
    %181 = arith.addf %179, %180 : vector<4x1xf32>
    %182 = math.rsqrt %181 : vector<4x1xf32>
    %183 = arith.mulf %15, %182 : vector<4x1xf32>
    %184 = vector.broadcast %183 : vector<4x1xf32> to vector<4x16xf32>
    %185 = arith.mulf %164, %184 : vector<4x16xf32>
    %186 = arith.mulf %170, %183 : vector<4x1xf32>
    %187 = arith.subf %16, %186 : vector<4x1xf32>
    %188 = vector.broadcast %187 : vector<4x1xf32> to vector<4x16xf32>
    %189 = arith.addf %185, %188 : vector<4x16xf32>
    %190 = vector.broadcast %45 : vector<1x16xf32> to vector<4x16xf32>
    %191 = arith.mulf %189, %190 : vector<4x16xf32>
    %192 = arith.addf %115, %153 : vector<4x16xf32>
    %193 = arith.addf %192, %191 : vector<4x16xf32>
    %cst_43 = arith.constant dense<0.000000e+00> : vector<32x16xf32>
    %194 = tpu.matmul %9, %193, %cst_43 {dimension_numbers = #tpu.dot_dimension_numbers<[1], [0], [0], [1], [0, 0, 1, 1], [], []>} : vector<32x4xf32>, vector<4x16xf32>, vector<32x16xf32> -> vector<32x16xf32>
    %195 = vector.broadcast %10 : vector<32x1xf32> to vector<32x16xf32>
    %196 = arith.addf %194, %195 : vector<32x16xf32>
    %cst_44 = arith.constant 0.000000e+00 : f32
    %197 = vector.broadcast %cst_44 : f32 to vector<32x16xf32>
    %198 = arith.cmpf ogt, %196, %197 : vector<32x16xf32>
    %cst_45 = arith.constant 0.00999999977 : f32
    %199 = vector.broadcast %cst_45 : f32 to vector<32x16xf32>
    %200 = arith.mulf %199, %196 : vector<32x16xf32>
    %201 = arith.select %198, %196, %200 : vector<32x16xi1>, vector<32x16xf32>
    %cst_46 = arith.constant dense<0.000000e+00> : vector<32x16xf32>
    %202 = tpu.matmul %11, %201, %cst_46 {dimension_numbers = #tpu.dot_dimension_numbers<[1], [0], [0], [1], [0, 0, 1, 1], [], []>} : vector<32x32xf32>, vector<32x16xf32>, vector<32x16xf32> -> vector<32x16xf32>
    %203 = vector.broadcast %12 : vector<32x1xf32> to vector<32x16xf32>
    %204 = arith.addf %202, %203 : vector<32x16xf32>
    %cst_47 = arith.constant 0.000000e+00 : f32
    %205 = vector.broadcast %cst_47 : f32 to vector<32x16xf32>
    %206 = arith.cmpf ogt, %204, %205 : vector<32x16xf32>
    %cst_48 = arith.constant 0.00999999977 : f32
    %207 = vector.broadcast %cst_48 : f32 to vector<32x16xf32>
    %208 = arith.mulf %207, %204 : vector<32x16xf32>
    %209 = arith.select %206, %204, %208 : vector<32x16xi1>, vector<32x16xf32>
    %cst_49 = arith.constant dense<0.000000e+00> : vector<4x16xf32>
    %210 = tpu.matmul %17, %209, %cst_49 {dimension_numbers = #tpu.dot_dimension_numbers<[1], [0], [0], [1], [0, 0, 1, 1], [], []>} : vector<4x32xf32>, vector<32x16xf32>, vector<4x16xf32> -> vector<4x16xf32>
    %211 = vector.broadcast %18 : vector<4x1xf32> to vector<4x16xf32>
    %212 = arith.addf %210, %211 : vector<4x16xf32>
    %cst_50 = arith.constant dense<0.000000e+00> : vector<4xf32>
    %213 = vector.multi_reduction <add>, %212, %cst_50 [1] : vector<4x16xf32> to vector<4xf32>
    %214 = vector.shape_cast %213 : vector<4xf32> to vector<4x1xf32>
    %cst_51 = arith.constant 1.600000e+01 : f32
    %215 = vector.broadcast %cst_51 : f32 to vector<4x1xf32>
    %216 = arith.divf %214, %215 : vector<4x1xf32>
    %217 = vector.broadcast %216 : vector<4x1xf32> to vector<4x16xf32>
    %218 = arith.subf %212, %217 : vector<4x16xf32>
    %219 = vector.broadcast %216 : vector<4x1xf32> to vector<4x16xf32>
    %220 = arith.subf %212, %219 : vector<4x16xf32>
    %221 = arith.mulf %218, %220 : vector<4x16xf32>
    %cst_52 = arith.constant dense<0.000000e+00> : vector<4xf32>
    %222 = vector.multi_reduction <add>, %221, %cst_52 [1] : vector<4x16xf32> to vector<4xf32>
    %223 = vector.shape_cast %222 : vector<4xf32> to vector<4x1xf32>
    %cst_53 = arith.constant 1.600000e+01 : f32
    %224 = vector.broadcast %cst_53 : f32 to vector<4x1xf32>
    %225 = arith.divf %223, %224 : vector<4x1xf32>
    %cst_54 = arith.constant 9.99999974E-6 : f32
    %226 = vector.broadcast %cst_54 : f32 to vector<4x1xf32>
    %227 = arith.addf %225, %226 : vector<4x1xf32>
    %228 = math.rsqrt %227 : vector<4x1xf32>
    %229 = arith.mulf %19, %228 : vector<4x1xf32>
    %230 = vector.broadcast %229 : vector<4x1xf32> to vector<4x16xf32>
    %231 = arith.mulf %212, %230 : vector<4x16xf32>
    %232 = arith.mulf %216, %229 : vector<4x1xf32>
    %233 = arith.subf %20, %232 : vector<4x1xf32>
    %234 = vector.broadcast %233 : vector<4x1xf32> to vector<4x16xf32>
    %235 = arith.addf %231, %234 : vector<4x16xf32>
    %c0_55 = arith.constant 0 : index
    %c0_56 = arith.constant 0 : index
    %236 = vector.load %arg3[%c0_55, %c0_56] : memref<4x16xf32, #tpu.memory_space<vmem>>, vector<4x16xf32>
    tpu.vector_store %arg3[%c0_55, %c0_56], %235 {strides = array<i32>} : memref<4x16xf32, #tpu.memory_space<vmem>>, vector<4x16xf32>,
    return
  }
}

</mosaic_0001>

<llo_original>
// kernel: _lambda_.1
$region0: #{_lambda_.1}
  #allocation0 [shape = 'u32[]', space=smem, size = 0x4, offset = 0x4, fixed_abs, tag = 'smem constant byte address 0x4 - core index']
  #allocation1 [shape = 'u32[144,128]{1,0:T(1,128)}', space=vmem, size = 0x12000, scoped, tag = 'internal scratch']
  %s0 = inlined_call_operand.vmem [shape: f32[4,16], index: 0, kind: input, shape index: {}]
  %s1 = inlined_call_operand.hbm [shape: f32[32,81], index: 1, kind: input, shape index: {}]
  %s2 = inlined_call_operand.vmem [shape: f32[4,70], index: 2, kind: input, shape index: {}]
  %s3 = inlined_call_operand.vmem [shape: f32[4,16], index: 3, kind: output, shape index: {}]
  %s4 = sld [smem:[#allocation0]]
  $region26: #{_lambda_.1} parent=0
    _
  %s6 = ssub.s32 1, %s4
  %s7 = scalar_select 0, %s6, %s4
  $region1: #{_lambda_.1} parent=0
    #allocation2 [shape = 'u8[16384]{0}', space=vmem, size = 0x4000, scoped, tag = 'input window, operand 1, single buffered']
    #allocation3 [shape = 's32[1]{0}', space=sflag, size = 0x4, scoped, tag = 'scoped memory for _lambda_.1']
    %8 = vsyncpa [#allocation3], 0
    // Predicated region
    $region2: #{_lambda_.1} parent=1 // pred_check
      _
    $region3: #{_lambda_.1} parent=1 // pred_check_branch
      %10 = sbr.rel (0) target = $region5
    $region4: #{_lambda_.1} parent=1 // pred_region
      _
    $region5: #{_lambda_.1} parent=1 // pred_fallthru
      _
    // Predicated region
    $region6: #{_lambda_.1} parent=1 // pred_check
      _
    $region7: #{_lambda_.1} parent=1 // pred_check_branch
      %12 = sbr.rel (0) target = $region9
    $region8: #{_lambda_.1} parent=1 // pred_region
      %s14 = ssub.s32 512, 512
      %15 = vsyncadd [#allocation3], %s14
      %s16 = sshll.u32 [#allocation2], 4
      %s17 = int_to_ptr.vmem [resolvable:$true] %s16
      %22 = dma.hbm_to_vmem [thread:$0]  %s1, 512, %s17, [#allocation3], 128, 128, 8
    $region9: #{_lambda_.1} parent=1 // pred_fallthru
      _
    // Predicated region
    $region10: #{_lambda_.1} parent=1 // pred_check
      _
    $region11: #{_lambda_.1} parent=1 // pred_check_branch
      %24 = sbr.rel (0) target = $region13
    $region12: #{_lambda_.1} parent=1 // pred_region
      _
    $region13: #{_lambda_.1} parent=1 // pred_fallthru
      _
    // Predicated region
    $region14: #{_lambda_.1} parent=1 // pred_check
      _
    $region15: #{_lambda_.1} parent=1 // pred_check_branch
      %26 = sbr.rel (0) target = $region17
    $region16: #{_lambda_.1} parent=1 // pred_region
      %27 = dma.done [#allocation3], 512
    $region17: #{_lambda_.1} parent=1 // pred_fallthru
      _
    %v28 = vld [vmem:[%s0] sm:$0xf]
    %v29 = vld [vmem:[#allocation2] sm:$0xff]
    %v30 = vld [vmem:[#allocation2 + $0x8] sm:$0xff]
    %v31 = vld [vmem:[#allocation2 + $0x10] sm:$0xff]
    %v32 = vld [vmem:[#allocation2 + $0x18] sm:$0xff]
    %v33 = vld [vmem:[%s2] sm:$0xf]
    %v34 = vlaneseq
    %v35 = vand.u32 %v34, 127
    %vm36 = vcmp.lt.s32.totalorder %v35, 0
    %v37 = vsub.s32 0, %v35
    %v38 = vsel %vm36, %v37, %v35
    %v39 = vshrl.u32 %v38, 3
    %v40 = vand.u32 %v38, 7
    %v41 = vsub.s32 0, %v40
    %v42 = vsel %vm36, %v41, %v40
    %vm43 = vcmp.ne.s32.totalorder %v42, 0
    %vm44 = vcmp.lt.s32.totalorder %v42, 0
    %vm45 = vmand %vm44, %vm43
    %v46 = vadd.s32 %v42, 8
    %v47 = vsel %vm45, %v46, %v42
    %vm48 = vcmp.ne.s32.totalorder %v47, 0
    %v49 = vsel %vm48, 1, 0
    %v50 = vcvt.s32.f32 %v49
    %vm51 = vcmp.ne.s32.totalorder %v47, 7
    %v52 = vsel %vm51, 1, 0
    %v53 = vcvt.s32.f32 %v52
    %vm54 = vcmask 31744
    %v56 = vsel %vm54, %v29, 0
    %v59 = vsel %vm54, %v30, 0
    %v62 = vsel %vm54, %v31, 0
    %v65 = vsel %vm54, %v32, 0
    %vm67 = vcmask 1043456
    %v69 = vsel %vm67, %v28, 0
    %71 = vmatprep.subr.mxu0 0.0
    %72 = vmatpush1.msra.mxu0 0.0
    %73 = vmatprep.subr.mxu0 0.0
    %74 = vmatpush1.msra.mxu0 0.0
    %75 = vmatprep.subr.mxu0 0.0
    %76 = vmatpush1.msra.mxu0 0.0
    %77 = vmatprep.subr.mxu0 0.0
    %78 = vmatpush1.msra.mxu0 0.0
    %79 = vmatprep.subr.mxu0 0.0
    %80 = vmatpush1.msra.mxu0 0.0
    %81 = vmatprep.subr.mxu0 0.0
    %82 = vmatpush1.msra.mxu0 0.0
    %83 = vmatprep.subr.mxu0 0.0
    %84 = vmatpush1.msra.mxu0 0.0
    %85 = vmatprep.subr.mxu0 0.0
    %86 = vmatpush1.msra.mxu0 0.0
    %87 = vmatprep.subr.mxu0 0.0
    %88 = vmatpush1.msra.mxu0 0.0
    %89 = vmatprep.subr.mxu0 0.0
    %90 = vmatpush1.msra.mxu0 0.0
    %91 = vmatprep.subr.mxu0 0.0
    %92 = vmatpush1.msra.mxu0 0.0
    %93 = vmatprep.subr.mxu0 0.0
    %94 = vmatpush1.msra.mxu0 0.0
    %95 = vmatprep.subr.mxu0 0.0
    %96 = vmatpush1.msra.mxu0 0.0
    %97 = vmatprep.subr.mxu0 0.0
    %98 = vmatpush1.msra.mxu0 0.0
    %99 = vmatprep.subr.mxu0 0.0
    %100 = vmatpush1.msra.mxu0 0.0
    %101 = vmatprep.subr.mxu0 0.0
    %102 = vmatpush1.msra.mxu0 %v69
    %103 = vmatprep.subr.mxu0 0.0
    %104 = vmatpush2.msra.mxu0 0.0
    %105 = vmatprep.subr.mxu0 0.0
    %106 = vmatpush2.msra.mxu0 0.0
    %107 = vmatprep.subr.mxu0 0.0
    %108 = vmatpush2.msra.mxu0 0.0
    %109 = vmatprep.subr.mxu0 0.0
    %110 = vmatpush2.msra.mxu0 0.0
    %111 = vmatprep.subr.mxu0 0.0
    %112 = vmatpush2.msra.mxu0 0.0
    %113 = vmatprep.subr.mxu0 0.0
    %114 = vmatpush2.msra.mxu0 0.0
    %115 = vmatprep.subr.mxu0 0.0
    %116 = vmatpush2.msra.mxu0 0.0
    %117 = vmatprep.subr.mxu0 0.0
    %118 = vmatpush2.msra.mxu0 0.0
    %119 = vmatprep.subr.mxu0 0.0
    %120 = vmatpush2.msra.mxu0 0.0
    %121 = vmatprep.subr.mxu0 0.0
    %122 = vmatpush2.msra.mxu0 0.0
    %123 = vmatprep.subr.mxu0 0.0
    %124 = vmatpush2.msra.mxu0 0.0
    %125 = vmatprep.subr.mxu0 0.0
    %126 = vmatpush2.msra.mxu0 0.0
    %127 = vmatprep.subr.mxu0 0.0
    %128 = vmatpush2.msra.mxu0 0.0
    %129 = vmatprep.subr.mxu0 0.0
    %130 = vmatpush2.msra.mxu0 0.0
    %131 = vmatprep.subr.mxu0 0.0
    %132 = vmatpush2.msra.mxu0 0.0
    %133 = vmatprep.subr.mxu0 0.0
    %134 = vmatpush2.msra.mxu0 0.0
    %135 = vmatprep.mubr.f32.mxu0 0.0
    %136 = vmatmul.mubr.f32.gmra.mxu0 %v56
    %v137 = vpop.f32.mrf.mxu0
    %v138 = vadd.f32 0.0, %v137
    %v139 = vpop.f32.mrf.mxu0
    %140 = vmatprep.mubr.f32.mxu0 0.0
    %141 = vmatmul.mubr.f32.gmra.mxu0 %v59
    %v142 = vpop.f32.mrf.mxu0
    %v143 = vadd.f32 0.0, %v142
    %v144 = vpop.f32.mrf.mxu0
    %145 = vmatprep.mubr.f32.mxu0 0.0
    %146 = vmatmul.mubr.f32.gmra.mxu0 %v62
    %v147 = vpop.f32.mrf.mxu0
    %v148 = vadd.f32 0.0, %v147
    %v149 = vpop.f32.mrf.mxu0
    %150 = vmatprep.mubr.f32.mxu0 0.0
    %151 = vmatmul.mubr.f32.gmra.mxu0 %v65
    %v152 = vpop.f32.mrf.mxu0
    %v153 = vadd.f32 0.0, %v152
    %v154 = vpop.f32.mrf.mxu0
    %155 = vdwg.mxu0
    %156 = vrot.lane.b32.xlu0 %v29, 124
    %v157 = vpop.permute.xlu0 %156
    %158 = vrot.lane.b32.xlu0 %v30, 124
    %v159 = vpop.permute.xlu0 %158
    %160 = vrot.lane.b32.xlu0 %v31, 124
    %v161 = vpop.permute.xlu0 %160
    %162 = vrot.lane.b32.xlu0 %v32, 124
    %v163 = vpop.permute.xlu0 %162
    %v164 = vsel %vm54, %v157, 0
    %v166 = vsel %vm54, %v159, 0
    %v168 = vsel %vm54, %v161, 0
    %v170 = vsel %vm54, %v163, 0
    %172 = vmatprep.subr.mxu0 0.0
    %173 = vmatpush1.msra.mxu0 0.0
    %174 = vmatprep.subr.mxu0 0.0
    %175 = vmatpush1.msra.mxu0 0.0
    %176 = vmatprep.subr.mxu0 0.0
    %177 = vmatpush1.msra.mxu0 0.0
    %178 = vmatprep.subr.mxu0 0.0
    %179 = vmatpush1.msra.mxu0 0.0
    %180 = vmatprep.subr.mxu0 0.0
    %181 = vmatpush1.msra.mxu0 0.0
    %182 = vmatprep.subr.mxu0 0.0
    %183 = vmatpush1.msra.mxu0 0.0
    %184 = vmatprep.subr.mxu0 0.0
    %185 = vmatpush1.msra.mxu0 0.0
    %186 = vmatprep.subr.mxu0 0.0
    %187 = vmatpush1.msra.mxu0 0.0
    %188 = vmatprep.subr.mxu0 0.0
    %189 = vmatpush1.msra.mxu0 0.0
    %190 = vmatprep.subr.mxu0 0.0
    %191 = vmatpush1.msra.mxu0 0.0
    %192 = vmatprep.subr.mxu0 0.0
    %193 = vmatpush1.msra.mxu0 0.0
    %194 = vmatprep.subr.mxu0 0.0
    %195 = vmatpush1.msra.mxu0 0.0
    %196 = vmatprep.subr.mxu0 0.0
    %197 = vmatpush1.msra.mxu0 0.0
    %198 = vmatprep.subr.mxu0 0.0
    %199 = vmatpush1.msra.mxu0 0.0
    %200 = vmatprep.subr.mxu0 0.0
    %201 = vmatpush1.msra.mxu0 0.0
    %202 = vmatprep.subr.mxu0 0.0
    %203 = vmatpush1.msra.mxu0 %v69
    %204 = vmatprep.subr.mxu0 0.0
    %205 = vmatpush2.msra.mxu0 0.0
    %206 = vmatprep.subr.mxu0 0.0
    %207 = vmatpush2.msra.mxu0 0.0
    %208 = vmatprep.subr.mxu0 0.0
    %209 = vmatpush2.msra.mxu0 0.0
    %210 = vmatprep.subr.mxu0 0.0
    %211 = vmatpush2.msra.mxu0 0.0
    %212 = vmatprep.subr.mxu0 0.0
    %213 = vmatpush2.msra.mxu0 0.0
    %214 = vmatprep.subr.mxu0 0.0
    %215 = vmatpush2.msra.mxu0 0.0
    %216 = vmatprep.subr.mxu0 0.0
    %217 = vmatpush2.msra.mxu0 0.0
    %218 = vmatprep.subr.mxu0 0.0
    %219 = vmatpush2.msra.mxu0 0.0
    %220 = vmatprep.subr.mxu0 0.0
    %221 = vmatpush2.msra.mxu0 0.0
    %222 = vmatprep.subr.mxu0 0.0
    %223 = vmatpush2.msra.mxu0 0.0
    %224 = vmatprep.subr.mxu0 0.0
    %225 = vmatpush2.msra.mxu0 0.0
    %226 = vmatprep.subr.mxu0 0.0
    %227 = vmatpush2.msra.mxu0 0.0
    %228 = vmatprep.subr.mxu0 0.0
    %229 = vmatpush2.msra.mxu0 0.0
    %230 = vmatprep.subr.mxu0 0.0
    %231 = vmatpush2.msra.mxu0 0.0
    %232 = vmatprep.subr.mxu0 0.0
    %233 = vmatpush2.msra.mxu0 0.0
    %234 = vmatprep.subr.mxu0 0.0
    %235 = vmatpush2.msra.mxu0 0.0
    %236 = vmatprep.mubr.f32.mxu0 0.0
    %237 = vmatmul.mubr.f32.gmra.mxu0 %v164
    %v238 = vpop.f32.mrf.mxu0
    %v239 = vadd.f32 0.0, %v238
    %v240 = vpop.f32.mrf.mxu0
    %241 = vmatprep.mubr.f32.mxu0 0.0
    %242 = vmatmul.mubr.f32.gmra.mxu0 %v166
    %v243 = vpop.f32.mrf.mxu0
    %v244 = vadd.f32 0.0, %v243
    %v245 = vpop.f32.mrf.mxu0
    %246 = vmatprep.mubr.f32.mxu0 0.0
    %247 = vmatmul.mubr.f32.gmra.mxu0 %v168
    %v248 = vpop.f32.mrf.mxu0
    %v249 = vadd.f32 0.0, %v248
    %v250 = vpop.f32.mrf.mxu0
    %251 = vmatprep.mubr.f32.mxu0 0.0
    %252 = vmatmul.mubr.f32.gmra.mxu0 %v170
    %v253 = vpop.f32.mrf.mxu0
    %v254 = vadd.f32 0.0, %v253
    %v255 = vpop.f32.mrf.mxu0
    %256 = vdwg.mxu0
    %261 = vrot.lane.b32.xlu0 %v239, 113
    %v262 = vpop.permute.xlu0 %261
    %263 = vrot.lane.b32.xlu0 %v244, 113
    %v264 = vpop.permute.xlu0 %263
    %265 = vrot.lane.b32.xlu0 %v249, 113
    %v266 = vpop.permute.xlu0 %265
    %267 = vrot.lane.b32.xlu0 %v254, 113
    %v268 = vpop.permute.xlu0 %267
    %273 = vrot.lane.b32.xlu0 %v239, 1
    %v274 = vpop.permute.xlu0 %273
    %275 = vrot.lane.b32.xlu0 %v244, 1
    %v276 = vpop.permute.xlu0 %275
    %277 = vrot.lane.b32.xlu0 %v249, 1
    %v278 = vpop.permute.xlu0 %277
    %279 = vrot.lane.b32.xlu0 %v254, 1
    %v280 = vpop.permute.xlu0 %279
    %vm285 = vcmask 7168
    %v286 = vsel %vm285, %v262, %v274
    %v287 = vsel %vm285, %v264, %v276
    %v288 = vsel %vm285, %v266, %v278
    %v289 = vsel %vm285, %v268, %v280
    %290 = vrot.lane.b32.xlu0 %v239, 127
    %v291 = vpop.permute.xlu0 %290
    %292 = vrot.lane.b32.xlu0 %v244, 127
    %v293 = vpop.permute.xlu0 %292
    %294 = vrot.lane.b32.xlu0 %v249, 127
    %v295 = vpop.permute.xlu0 %294
    %296 = vrot.lane.b32.xlu0 %v254, 127
    %v297 = vpop.permute.xlu0 %296
    %302 = vrot.lane.b32.xlu0 %v239, 15
    %v303 = vpop.permute.xlu0 %302
    %304 = vrot.lane.b32.xlu0 %v244, 15
    %v305 = vpop.permute.xlu0 %304
    %306 = vrot.lane.b32.xlu0 %v249, 15
    %v307 = vpop.permute.xlu0 %306
    %308 = vrot.lane.b32.xlu0 %v254, 15
    %v309 = vpop.permute.xlu0 %308
    %vm314 = vcmask 121856
    %v315 = vsel %vm314, %v291, %v303
    %v316 = vsel %vm314, %v293, %v305
    %v317 = vsel %vm314, %v295, %v307
    %v318 = vsel %vm314, %v297, %v309
    %v319 = vadd.f32 %v138, %v239
    %v320 = vadd.f32 %v143, %v244
    %v321 = vadd.f32 %v148, %v249
    %v322 = vadd.f32 %v153, %v254
    %323 = vset.pattern.permute.xlu0 9
    %324 = vperm.xlu0 %323, %v29
    %v325 = vpop.permute.xlu0 %324
    %327 = vset.pattern.permute.xlu0 9
    %328 = vperm.xlu0 %327, %v30
    %v329 = vpop.permute.xlu0 %328
    %331 = vset.pattern.permute.xlu0 9
    %332 = vperm.xlu0 %331, %v31
    %v333 = vpop.permute.xlu0 %332
    %335 = vset.pattern.permute.xlu0 9
    %336 = vperm.xlu0 %335, %v32
    %v337 = vpop.permute.xlu0 %336
    %v339 = vadd.f32 %v319, %v325
    %v340 = vadd.f32 %v320, %v329
    %v341 = vadd.f32 %v321, %v333
    %v342 = vadd.f32 %v322, %v337
    %vm343 = vcmp.gt.f32.partialorder %v339, 0.0
    %vm344 = vcmp.gt.f32.partialorder %v340, 0.0
    %vm345 = vcmp.gt.f32.partialorder %v341, 0.0
    %vm346 = vcmp.gt.f32.partialorder %v342, 0.0
    %v347 = vmul.f32 %v339, 0.01
    %v348 = vmul.f32 %v340, 0.01
    %v349 = vmul.f32 %v341, 0.01
    %v350 = vmul.f32 %v342, 0.01
    %v351 = vsel %vm343, %v339, %v347
    %v352 = vsel %vm344, %v340, %v348
    %v353 = vsel %vm345, %v341, %v349
    %v354 = vsel %vm346, %v342, %v350
    %v355 = vadd.f32 %v138, %v286
    %v356 = vadd.f32 %v143, %v287
    %v357 = vadd.f32 %v148, %v288
    %v358 = vadd.f32 %v153, %v289
    %359 = vset.pattern.permute.xlu0 8
    %360 = vperm.xlu0 %359, %v29
    %v361 = vpop.permute.xlu0 %360
    %363 = vset.pattern.permute.xlu0 8
    %364 = vperm.xlu0 %363, %v30
    %v365 = vpop.permute.xlu0 %364
    %367 = vset.pattern.permute.xlu0 8
    %368 = vperm.xlu0 %367, %v31
    %v369 = vpop.permute.xlu0 %368
    %371 = vset.pattern.permute.xlu0 8
    %372 = vperm.xlu0 %371, %v32
    %v373 = vpop.permute.xlu0 %372
    %v375 = vadd.f32 %v355, %v361
    %v376 = vadd.f32 %v356, %v365
    %v377 = vadd.f32 %v357, %v369
    %v378 = vadd.f32 %v358, %v373
    %v379 = vadd.f32 %v375, %v325
    %v380 = vadd.f32 %v376, %v329
    %v381 = vadd.f32 %v377, %v333
    %v382 = vadd.f32 %v378, %v337
    %vm383 = vcmp.gt.f32.partialorder %v379, 0.0
    %vm384 = vcmp.gt.f32.partialorder %v380, 0.0
    %vm385 = vcmp.gt.f32.partialorder %v381, 0.0
    %vm386 = vcmp.gt.f32.partialorder %v382, 0.0
    %v387 = vmul.f32 %v379, 0.01
    %v388 = vmul.f32 %v380, 0.01
    %v389 = vmul.f32 %v381, 0.01
    %v390 = vmul.f32 %v382, 0.01
    %v391 = vsel %vm383, %v379, %v387
    %v392 = vsel %vm384, %v380, %v388
    %v393 = vsel %vm385, %v381, %v389
    %v394 = vsel %vm386, %v382, %v390
    %v395 = vadd.f32 %v138, %v315
    %v396 = vadd.f32 %v143, %v316
    %v397 = vadd.f32 %v148, %v317
    %v398 = vadd.f32 %v153, %v318
    %v399 = vsub.f32 %v395, %v361
    %v400 = vsub.f32 %v396, %v365
    %v401 = vsub.f32 %v397, %v369
    %v402 = vsub.f32 %v398, %v373
    %v403 = vadd.f32 %v399, %v325
    %v404 = vadd.f32 %v400, %v329
    %v405 = vadd.f32 %v401, %v333
    %v406 = vadd.f32 %v402, %v337
    %vm407 = vcmp.gt.f32.partialorder %v403, 0.0
    %vm408 = vcmp.gt.f32.partialorder %v404, 0.0
    %vm409 = vcmp.gt.f32.partialorder %v405, 0.0
    %vm410 = vcmp.gt.f32.partialorder %v406, 0.0
    %v411 = vmul.f32 %v403, 0.01
    %v412 = vmul.f32 %v404, 0.01
    %v413 = vmul.f32 %v405, 0.01
    %v414 = vmul.f32 %v406, 0.01
    %v415 = vsel %vm407, %v403, %v411
    %v416 = vsel %vm408, %v404, %v412
    %v417 = vsel %vm409, %v405, %v413
    %v418 = vsel %vm410, %v406, %v414
    %419 = vset.pattern.permute.xlu0 42
    %420 = vperm.xlu0 %419, %v29
    %v421 = vpop.permute.xlu0 %420
    %423 = vset.pattern.permute.xlu0 42
    %424 = vperm.xlu0 %423, %v30
    %v425 = vpop.permute.xlu0 %424
    %427 = vset.pattern.permute.xlu0 42
    %428 = vperm.xlu0 %427, %v31
    %v429 = vpop.permute.xlu0 %428
    %431 = vset.pattern.permute.xlu0 42
    %432 = vperm.xlu0 %431, %v32
    %v433 = vpop.permute.xlu0 %432
    %435 = vrot.lane.b32.xlu0 %v29, 118
    %v436 = vpop.permute.xlu0 %435
    %437 = vrot.lane.b32.xlu0 %v30, 118
    %v438 = vpop.permute.xlu0 %437
    %439 = vrot.lane.b32.xlu0 %v31, 118
    %v440 = vpop.permute.xlu0 %439
    %441 = vrot.lane.b32.xlu0 %v32, 118
    %v442 = vpop.permute.xlu0 %441
    %vm443 = vcmask 261120
    %v444 = vsel %vm443, %v436, 0
    %v446 = vsel %vm443, %v438, 0
    %v448 = vsel %vm443, %v440, 0
    %v450 = vsel %vm443, %v442, 0
    %452 = vmatprep.subr.mxu0 0.0
    %453 = vmatpush1.msra.mxu0 0.0
    %454 = vmatprep.subr.mxu0 0.0
    %455 = vmatpush1.msra.mxu0 0.0
    %456 = vmatprep.subr.mxu0 0.0
    %457 = vmatpush1.msra.mxu0 0.0
    %458 = vmatprep.subr.mxu0 0.0
    %459 = vmatpush1.msra.mxu0 0.0
    %460 = vmatprep.subr.mxu0 0.0
    %461 = vmatpush1.msra.mxu0 0.0
    %462 = vmatprep.subr.mxu0 0.0
    %463 = vmatpush1.msra.mxu0 0.0
    %464 = vmatprep.subr.mxu0 0.0
    %465 = vmatpush1.msra.mxu0 0.0
    %466 = vmatprep.subr.mxu0 0.0
    %467 = vmatpush1.msra.mxu0 0.0
    %468 = vmatprep.subr.mxu0 0.0
    %469 = vmatpush1.msra.mxu0 0.0
    %470 = vmatprep.subr.mxu0 0.0
    %471 = vmatpush1.msra.mxu0 0.0
    %472 = vmatprep.subr.mxu0 0.0
    %473 = vmatpush1.msra.mxu0 0.0
    %474 = vmatprep.subr.mxu0 0.0
    %475 = vmatpush1.msra.mxu0 0.0
    %476 = vmatprep.subr.mxu0 0.0
    %477 = vmatpush1.msra.mxu0 %v354
    %478 = vmatprep.subr.mxu0 0.0
    %479 = vmatpush1.msra.mxu0 %v353
    %480 = vmatprep.subr.mxu0 0.0
    %481 = vmatpush1.msra.mxu0 %v352
    %482 = vmatprep.subr.mxu0 0.0
    %483 = vmatpush1.msra.mxu0 %v351
    %484 = vmatprep.subr.mxu0 0.0
    %485 = vmatpush2.msra.mxu0 0.0
    %486 = vmatprep.subr.mxu0 0.0
    %487 = vmatpush2.msra.mxu0 0.0
    %488 = vmatprep.subr.mxu0 0.0
    %489 = vmatpush2.msra.mxu0 0.0
    %490 = vmatprep.subr.mxu0 0.0
    %491 = vmatpush2.msra.mxu0 0.0
    %492 = vmatprep.subr.mxu0 0.0
    %493 = vmatpush2.msra.mxu0 0.0
    %494 = vmatprep.subr.mxu0 0.0
    %495 = vmatpush2.msra.mxu0 0.0
    %496 = vmatprep.subr.mxu0 0.0
    %497 = vmatpush2.msra.mxu0 0.0
    %498 = vmatprep.subr.mxu0 0.0
    %499 = vmatpush2.msra.mxu0 0.0
    %500 = vmatprep.subr.mxu0 0.0
    %501 = vmatpush2.msra.mxu0 0.0
    %502 = vmatprep.subr.mxu0 0.0
    %503 = vmatpush2.msra.mxu0 0.0
    %504 = vmatprep.subr.mxu0 0.0
    %505 = vmatpush2.msra.mxu0 0.0
    %506 = vmatprep.subr.mxu0 0.0
    %507 = vmatpush2.msra.mxu0 0.0
    %508 = vmatprep.subr.mxu0 0.0
    %509 = vmatpush2.msra.mxu0 0.0
    %510 = vmatprep.subr.mxu0 0.0
    %511 = vmatpush2.msra.mxu0 0.0
    %512 = vmatprep.subr.mxu0 0.0
    %513 = vmatpush2.msra.mxu0 0.0
    %514 = vmatprep.subr.mxu0 0.0
    %515 = vmatpush2.msra.mxu0 0.0
    %516 = vmatprep.mubr.f32.mxu0 0.0
    %517 = vmatmul.mubr.f32.gmra.mxu0 %v444
    %v518 = vpop.f32.mrf.mxu0
    %v519 = vadd.f32 %v421, %v518
    %v520 = vpop.f32.mrf.mxu0
    %521 = vmatprep.mubr.f32.mxu0 0.0
    %522 = vmatmul.mubr.f32.gmra.mxu0 %v446
    %v523 = vpop.f32.mrf.mxu0
    %v524 = vadd.f32 %v425, %v523
    %v525 = vpop.f32.mrf.mxu0
    %526 = vmatprep.mubr.f32.mxu0 0.0
    %527 = vmatmul.mubr.f32.gmra.mxu0 %v448
    %v528 = vpop.f32.mrf.mxu0
    %v529 = vadd.f32 %v429, %v528
    %v530 = vpop.f32.mrf.mxu0
    %531 = vmatprep.mubr.f32.mxu0 0.0
    %532 = vmatmul.mubr.f32.gmra.mxu0 %v450
    %v533 = vpop.f32.mrf.mxu0
    %v534 = vadd.f32 %v433, %v533
    %v535 = vpop.f32.mrf.mxu0
    %536 = vdwg.mxu0
    %vm537 = vcmp.gt.f32.partialorder %v519, 0.0
    %vm538 = vcmp.gt.f32.partialorder %v524, 0.0
    %vm539 = vcmp.gt.f32.partialorder %v529, 0.0
    %vm540 = vcmp.gt.f32.partialorder %v534, 0.0
    %v541 = vmul.f32 %v519, 0.01
    %v542 = vmul.f32 %v524, 0.01
    %v543 = vmul.f32 %v529, 0.01
    %v544 = vmul.f32 %v534, 0.01
    %v545 = vsel %vm537, %v519, %v541
    %v546 = vsel %vm538, %v524, %v542
    %v547 = vsel %vm539, %v529, %v543
    %v548 = vsel %vm540, %v534, %v544
    %550 = vset.pattern.permute.xlu0 32
    %551 = vperm.xlu0 %550, %v33
    %v552 = vpop.permute.xlu0 %551
    %v554 = vsel %vm443, %v33, 0
    %556 = vmatprep.subr.mxu0 0.0
    %557 = vmatpush1.msra.mxu0 0.0
    %558 = vmatprep.subr.mxu0 0.0
    %559 = vmatpush1.msra.mxu0 0.0
    %560 = vmatprep.subr.mxu0 0.0
    %561 = vmatpush1.msra.mxu0 0.0
    %562 = vmatprep.subr.mxu0 0.0
    %563 = vmatpush1.msra.mxu0 0.0
    %564 = vmatprep.subr.mxu0 0.0
    %565 = vmatpush1.msra.mxu0 0.0
    %566 = vmatprep.subr.mxu0 0.0
    %567 = vmatpush1.msra.mxu0 0.0
    %568 = vmatprep.subr.mxu0 0.0
    %569 = vmatpush1.msra.mxu0 0.0
    %570 = vmatprep.subr.mxu0 0.0
    %571 = vmatpush1.msra.mxu0 0.0
    %572 = vmatprep.subr.mxu0 0.0
    %573 = vmatpush1.msra.mxu0 0.0
    %574 = vmatprep.subr.mxu0 0.0
    %575 = vmatpush1.msra.mxu0 0.0
    %576 = vmatprep.subr.mxu0 0.0
    %577 = vmatpush1.msra.mxu0 0.0
    %578 = vmatprep.subr.mxu0 0.0
    %579 = vmatpush1.msra.mxu0 0.0
    %580 = vmatprep.subr.mxu0 0.0
    %581 = vmatpush1.msra.mxu0 %v548
    %582 = vmatprep.subr.mxu0 0.0
    %583 = vmatpush1.msra.mxu0 %v547
    %584 = vmatprep.subr.mxu0 0.0
    %585 = vmatpush1.msra.mxu0 %v546
    %586 = vmatprep.subr.mxu0 0.0
    %587 = vmatpush1.msra.mxu0 %v545
    %588 = vmatprep.subr.mxu0 0.0
    %589 = vmatpush2.msra.mxu0 0.0
    %590 = vmatprep.subr.mxu0 0.0
    %591 = vmatpush2.msra.mxu0 0.0
    %592 = vmatprep.subr.mxu0 0.0
    %593 = vmatpush2.msra.mxu0 0.0
    %594 = vmatprep.subr.mxu0 0.0
    %595 = vmatpush2.msra.mxu0 0.0
    %596 = vmatprep.subr.mxu0 0.0
    %597 = vmatpush2.msra.mxu0 0.0
    %598 = vmatprep.subr.mxu0 0.0
    %599 = vmatpush2.msra.mxu0 0.0
    %600 = vmatprep.subr.mxu0 0.0
    %601 = vmatpush2.msra.mxu0 0.0
    %602 = vmatprep.subr.mxu0 0.0
    %603 = vmatpush2.msra.mxu0 0.0
    %604 = vmatprep.subr.mxu0 0.0
    %605 = vmatpush2.msra.mxu0 0.0
    %606 = vmatprep.subr.mxu0 0.0
    %607 = vmatpush2.msra.mxu0 0.0
    %608 = vmatprep.subr.mxu0 0.0
    %609 = vmatpush2.msra.mxu0 0.0
    %610 = vmatprep.subr.mxu0 0.0
    %611 = vmatpush2.msra.mxu0 0.0
    %612 = vmatprep.subr.mxu0 0.0
    %613 = vmatpush2.msra.mxu0 0.0
    %614 = vmatprep.subr.mxu0 0.0
    %615 = vmatpush2.msra.mxu0 0.0
    %616 = vmatprep.subr.mxu0 0.0
    %617 = vmatpush2.msra.mxu0 0.0
    %618 = vmatprep.subr.mxu0 0.0
    %619 = vmatpush2.msra.mxu0 0.0
    %620 = vmatprep.mubr.f32.mxu0 0.0
    %621 = vmatmul.mubr.f32.gmra.mxu0 %v554
    %v622 = vpop.f32.mrf.mxu0
    %v623 = vadd.f32 %v552, %v622
    %v624 = vpop.f32.mrf.mxu0
    %625 = vdwg.mxu0
    %vm626 = vcmask 125952
    %v627 = vsel %vm626, %v623, 0.0
    %628 = vadd.xlane.f32.xlu0 %v627
    %v629 = vpop.xlane.xlu0 %628
    %v630 = vrcp.pop 16.0
    %v631 = vmul.f32 %v629, %v630
    %v632 = vsub.f32 %v623, %v631
    %v633 = vmul.f32 %v632, %v632
    %v634 = vsel %vm626, %v633, 0.0
    %635 = vadd.xlane.f32.xlu0 %v634
    %v636 = vpop.xlane.xlu0 %635
    %v637 = vmul.f32 %v636, %v630
    %v638 = vadd.f32 %v637, 1e-05
    %v639 = vrsqrt.pop %v638
    %v640 = vmul.f32 %v33, %v639
    %642 = vset.pattern.permute.xlu0 33
    %643 = vperm.xlu0 %642, %v640
    %v644 = vpop.permute.xlu0 %643
    %v646 = vmul.f32 %v623, %v644
    %v647 = vmul.f32 %v631, %v640
    %649 = vrot.lane.b32.xlu0 %v647, 1
    %v650 = vpop.permute.xlu0 %649
    %v652 = vsub.f32 %v33, %v650
    %654 = vset.pattern.permute.xlu0 34
    %655 = vperm.xlu0 %654, %v652
    %v656 = vpop.permute.xlu0 %655
    %v658 = vadd.f32 %v646, %v656
    %659 = vmatprep.subr.mxu0 0.0
    %660 = vmatpush1.msra.mxu0 0.0
    %661 = vmatprep.subr.mxu0 0.0
    %662 = vmatpush1.msra.mxu0 0.0
    %663 = vmatprep.subr.mxu0 0.0
    %664 = vmatpush1.msra.mxu0 0.0
    %665 = vmatprep.subr.mxu0 0.0
    %666 = vmatpush1.msra.mxu0 0.0
    %667 = vmatprep.subr.mxu0 0.0
    %668 = vmatpush1.msra.mxu0 0.0
    %669 = vmatprep.subr.mxu0 0.0
    %670 = vmatpush1.msra.mxu0 0.0
    %671 = vmatprep.subr.mxu0 0.0
    %672 = vmatpush1.msra.mxu0 0.0
    %673 = vmatprep.subr.mxu0 0.0
    %674 = vmatpush1.msra.mxu0 0.0
    %675 = vmatprep.subr.mxu0 0.0
    %676 = vmatpush1.msra.mxu0 0.0
    %677 = vmatprep.subr.mxu0 0.0
    %678 = vmatpush1.msra.mxu0 0.0
    %679 = vmatprep.subr.mxu0 0.0
    %680 = vmatpush1.msra.mxu0 0.0
    %681 = vmatprep.subr.mxu0 0.0
    %682 = vmatpush1.msra.mxu0 0.0
    %683 = vmatprep.subr.mxu0 0.0
    %684 = vmatpush1.msra.mxu0 %v394
    %685 = vmatprep.subr.mxu0 0.0
    %686 = vmatpush1.msra.mxu0 %v393
    %687 = vmatprep.subr.mxu0 0.0
    %688 = vmatpush1.msra.mxu0 %v392
    %689 = vmatprep.subr.mxu0 0.0
    %690 = vmatpush1.msra.mxu0 %v391
    %691 = vmatprep.subr.mxu0 0.0
    %692 = vmatpush2.msra.mxu0 0.0
    %693 = vmatprep.subr.mxu0 0.0
    %694 = vmatpush2.msra.mxu0 0.0
    %695 = vmatprep.subr.mxu0 0.0
    %696 = vmatpush2.msra.mxu0 0.0
    %697 = vmatprep.subr.mxu0 0.0
    %698 = vmatpush2.msra.mxu0 0.0
    %699 = vmatprep.subr.mxu0 0.0
    %700 = vmatpush2.msra.mxu0 0.0
    %701 = vmatprep.subr.mxu0 0.0
    %702 = vmatpush2.msra.mxu0 0.0
    %703 = vmatprep.subr.mxu0 0.0
    %704 = vmatpush2.msra.mxu0 0.0
    %705 = vmatprep.subr.mxu0 0.0
    %706 = vmatpush2.msra.mxu0 0.0
    %707 = vmatprep.subr.mxu0 0.0
    %708 = vmatpush2.msra.mxu0 0.0
    %709 = vmatprep.subr.mxu0 0.0
    %710 = vmatpush2.msra.mxu0 0.0
    %711 = vmatprep.subr.mxu0 0.0
    %712 = vmatpush2.msra.mxu0 0.0
    %713 = vmatprep.subr.mxu0 0.0
    %714 = vmatpush2.msra.mxu0 0.0
    %715 = vmatprep.subr.mxu0 0.0
    %716 = vmatpush2.msra.mxu0 0.0
    %717 = vmatprep.subr.mxu0 0.0
    %718 = vmatpush2.msra.mxu0 0.0
    %719 = vmatprep.subr.mxu0 0.0
    %720 = vmatpush2.msra.mxu0 0.0
    %721 = vmatprep.subr.mxu0 0.0
    %722 = vmatpush2.msra.mxu0 0.0
    %723 = vmatprep.mubr.f32.mxu0 0.0
    %724 = vmatmul.mubr.f32.gmra.mxu0 %v444
    %v725 = vpop.f32.mrf.mxu0
    %v726 = vadd.f32 %v421, %v725
    %v727 = vpop.f32.mrf.mxu0
    %728 = vmatprep.mubr.f32.mxu0 0.0
    %729 = vmatmul.mubr.f32.gmra.mxu0 %v446
    %v730 = vpop.f32.mrf.mxu0
    %v731 = vadd.f32 %v425, %v730
    %v732 = vpop.f32.mrf.mxu0
    %733 = vmatprep.mubr.f32.mxu0 0.0
    %734 = vmatmul.mubr.f32.gmra.mxu0 %v448
    %v735 = vpop.f32.mrf.mxu0
    %v736 = vadd.f32 %v429, %v735
    %v737 = vpop.f32.mrf.mxu0
    %738 = vmatprep.mubr.f32.mxu0 0.0
    %739 = vmatmul.mubr.f32.gmra.mxu0 %v450
    %v740 = vpop.f32.mrf.mxu0
    %v741 = vadd.f32 %v433, %v740
    %v742 = vpop.f32.mrf.mxu0
    %743 = vdwg.mxu0
    %vm744 = vcmp.gt.f32.partialorder %v726, 0.0
    %vm745 = vcmp.gt.f32.partialorder %v731, 0.0
    %vm746 = vcmp.gt.f32.partialorder %v736, 0.0
    %vm747 = vcmp.gt.f32.partialorder %v741, 0.0
    %v748 = vmul.f32 %v726, 0.01
    %v749 = vmul.f32 %v731, 0.01
    %v750 = vmul.f32 %v736, 0.01
    %v751 = vmul.f32 %v741, 0.01
    %v752 = vsel %vm744, %v726, %v748
    %v753 = vsel %vm745, %v731, %v749
    %v754 = vsel %vm746, %v736, %v750
    %v755 = vsel %vm747, %v741, %v751
    %756 = vmatprep.subr.mxu0 0.0
    %757 = vmatpush1.msra.mxu0 0.0
    %758 = vmatprep.subr.mxu0 0.0
    %759 = vmatpush1.msra.mxu0 0.0
    %760 = vmatprep.subr.mxu0 0.0
    %761 = vmatpush1.msra.mxu0 0.0
    %762 = vmatprep.subr.mxu0 0.0
    %763 = vmatpush1.msra.mxu0 0.0
    %764 = vmatprep.subr.mxu0 0.0
    %765 = vmatpush1.msra.mxu0 0.0
    %766 = vmatprep.subr.mxu0 0.0
    %767 = vmatpush1.msra.mxu0 0.0
    %768 = vmatprep.subr.mxu0 0.0
    %769 = vmatpush1.msra.mxu0 0.0
    %770 = vmatprep.subr.mxu0 0.0
    %771 = vmatpush1.msra.mxu0 0.0
    %772 = vmatprep.subr.mxu0 0.0
    %773 = vmatpush1.msra.mxu0 0.0
    %774 = vmatprep.subr.mxu0 0.0
    %775 = vmatpush1.msra.mxu0 0.0
    %776 = vmatprep.subr.mxu0 0.0
    %777 = vmatpush1.msra.mxu0 0.0
    %778 = vmatprep.subr.mxu0 0.0
    %779 = vmatpush1.msra.mxu0 0.0
    %780 = vmatprep.subr.mxu0 0.0
    %781 = vmatpush1.msra.mxu0 %v755
    %782 = vmatprep.subr.mxu0 0.0
    %783 = vmatpush1.msra.mxu0 %v754
    %784 = vmatprep.subr.mxu0 0.0
    %785 = vmatpush1.msra.mxu0 %v753
    %786 = vmatprep.subr.mxu0 0.0
    %787 = vmatpush1.msra.mxu0 %v752
    %788 = vmatprep.subr.mxu0 0.0
    %789 = vmatpush2.msra.mxu0 0.0
    %790 = vmatprep.subr.mxu0 0.0
    %791 = vmatpush2.msra.mxu0 0.0
    %792 = vmatprep.subr.mxu0 0.0
    %793 = vmatpush2.msra.mxu0 0.0
    %794 = vmatprep.subr.mxu0 0.0
    %795 = vmatpush2.msra.mxu0 0.0
    %796 = vmatprep.subr.mxu0 0.0
    %797 = vmatpush2.msra.mxu0 0.0
    %798 = vmatprep.subr.mxu0 0.0
    %799 = vmatpush2.msra.mxu0 0.0
    %800 = vmatprep.subr.mxu0 0.0
    %801 = vmatpush2.msra.mxu0 0.0
    %802 = vmatprep.subr.mxu0 0.0
    %803 = vmatpush2.msra.mxu0 0.0
    %804 = vmatprep.subr.mxu0 0.0
    %805 = vmatpush2.msra.mxu0 0.0
    %806 = vmatprep.subr.mxu0 0.0
    %807 = vmatpush2.msra.mxu0 0.0
    %808 = vmatprep.subr.mxu0 0.0
    %809 = vmatpush2.msra.mxu0 0.0
    %810 = vmatprep.subr.mxu0 0.0
    %811 = vmatpush2.msra.mxu0 0.0
    %812 = vmatprep.subr.mxu0 0.0
    %813 = vmatpush2.msra.mxu0 0.0
    %814 = vmatprep.subr.mxu0 0.0
    %815 = vmatpush2.msra.mxu0 0.0
    %816 = vmatprep.subr.mxu0 0.0
    %817 = vmatpush2.msra.mxu0 0.0
    %818 = vmatprep.subr.mxu0 0.0
    %819 = vmatpush2.msra.mxu0 0.0
    %820 = vmatprep.mubr.f32.mxu0 0.0
    %821 = vmatmul.mubr.f32.gmra.mxu0 %v554
    %v822 = vpop.f32.mrf.mxu0
    %v823 = vadd.f32 %v552, %v822
    %v824 = vpop.f32.mrf.mxu0
    %825 = vdwg.mxu0
    %v826 = vmul.f32 %v823, %v50
    %v827 = vsel %vm626, %v826, 0.0
    %828 = vadd.xlane.f32.xlu0 %v827
    %v829 = vpop.xlane.xlu0 %828
    %v830 = vmul.f32 %v829, 0.071428575
    %v831 = vsub.f32 %v823, %v830
    %v832 = vmul.f32 %v831, %v831
    %v833 = vmul.f32 %v832, %v50
    %v834 = vsel %vm626, %v833, 0.0
    %835 = vadd.xlane.f32.xlu0 %v834
    %v836 = vpop.xlane.xlu0 %835
    %v837 = vmul.f32 %v836, 0.071428575
    %v838 = vadd.f32 %v837, 1e-05
    %v839 = vrsqrt.pop %v838
    %v840 = vmul.f32 %v33, %v839
    %842 = vset.pattern.permute.xlu0 33
    %843 = vperm.xlu0 %842, %v840
    %v844 = vpop.permute.xlu0 %843
    %v846 = vmul.f32 %v823, %v844
    %v847 = vmul.f32 %v830, %v840
    %849 = vrot.lane.b32.xlu0 %v847, 1
    %v850 = vpop.permute.xlu0 %849
    %v852 = vsub.f32 %v33, %v850
    %854 = vset.pattern.permute.xlu0 34
    %855 = vperm.xlu0 %854, %v852
    %v856 = vpop.permute.xlu0 %855
    %v858 = vadd.f32 %v846, %v856
    %v859 = vmul.f32 %v858, %v50
    %860 = vmatprep.subr.mxu0 0.0
    %861 = vmatpush1.msra.mxu0 0.0
    %862 = vmatprep.subr.mxu0 0.0
    %863 = vmatpush1.msra.mxu0 0.0
    %864 = vmatprep.subr.mxu0 0.0
    %865 = vmatpush1.msra.mxu0 0.0
    %866 = vmatprep.subr.mxu0 0.0
    %867 = vmatpush1.msra.mxu0 0.0
    %868 = vmatprep.subr.mxu0 0.0
    %869 = vmatpush1.msra.mxu0 0.0
    %870 = vmatprep.subr.mxu0 0.0
    %871 = vmatpush1.msra.mxu0 0.0
    %872 = vmatprep.subr.mxu0 0.0
    %873 = vmatpush1.msra.mxu0 0.0
    %874 = vmatprep.subr.mxu0 0.0
    %875 = vmatpush1.msra.mxu0 0.0
    %876 = vmatprep.subr.mxu0 0.0
    %877 = vmatpush1.msra.mxu0 0.0
    %878 = vmatprep.subr.mxu0 0.0
    %879 = vmatpush1.msra.mxu0 0.0
    %880 = vmatprep.subr.mxu0 0.0
    %881 = vmatpush1.msra.mxu0 0.0
    %882 = vmatprep.subr.mxu0 0.0
    %883 = vmatpush1.msra.mxu0 0.0
    %884 = vmatprep.subr.mxu0 0.0
    %885 = vmatpush1.msra.mxu0 %v418
    %886 = vmatprep.subr.mxu0 0.0
    %887 = vmatpush1.msra.mxu0 %v417
    %888 = vmatprep.subr.mxu0 0.0
    %889 = vmatpush1.msra.mxu0 %v416
    %890 = vmatprep.subr.mxu0 0.0
    %891 = vmatpush1.msra.mxu0 %v415
    %892 = vmatprep.subr.mxu0 0.0
    %893 = vmatpush2.msra.mxu0 0.0
    %894 = vmatprep.subr.mxu0 0.0
    %895 = vmatpush2.msra.mxu0 0.0
    %896 = vmatprep.subr.mxu0 0.0
    %897 = vmatpush2.msra.mxu0 0.0
    %898 = vmatprep.subr.mxu0 0.0
    %899 = vmatpush2.msra.mxu0 0.0
    %900 = vmatprep.subr.mxu0 0.0
    %901 = vmatpush2.msra.mxu0 0.0
    %902 = vmatprep.subr.mxu0 0.0
    %903 = vmatpush2.msra.mxu0 0.0
    %904 = vmatprep.subr.mxu0 0.0
    %905 = vmatpush2.msra.mxu0 0.0
    %906 = vmatprep.subr.mxu0 0.0
    %907 = vmatpush2.msra.mxu0 0.0
    %908 = vmatprep.subr.mxu0 0.0
    %909 = vmatpush2.msra.mxu0 0.0
    %910 = vmatprep.subr.mxu0 0.0
    %911 = vmatpush2.msra.mxu0 0.0
    %912 = vmatprep.subr.mxu0 0.0
    %913 = vmatpush2.msra.mxu0 0.0
    %914 = vmatprep.subr.mxu0 0.0
    %915 = vmatpush2.msra.mxu0 0.0
    %916 = vmatprep.subr.mxu0 0.0
    %917 = vmatpush2.msra.mxu0 0.0
    %918 = vmatprep.subr.mxu0 0.0
    %919 = vmatpush2.msra.mxu0 0.0
    %920 = vmatprep.subr.mxu0 0.0
    %921 = vmatpush2.msra.mxu0 0.0
    %922 = vmatprep.subr.mxu0 0.0
    %923 = vmatpush2.msra.mxu0 0.0
    %924 = vmatprep.mubr.f32.mxu0 0.0
    %925 = vmatmul.mubr.f32.gmra.mxu0 %v444
    %v926 = vpop.f32.mrf.mxu0
    %v927 = vadd.f32 %v421, %v926
    %v928 = vpop.f32.mrf.mxu0
    %929 = vmatprep.mubr.f32.mxu0 0.0
    %930 = vmatmul.mubr.f32.gmra.mxu0 %v446
    %v931 = vpop.f32.mrf.mxu0
    %v932 = vadd.f32 %v425, %v931
    %v933 = vpop.f32.mrf.mxu0
    %934 = vmatprep.mubr.f32.mxu0 0.0
    %935 = vmatmul.mubr.f32.gmra.mxu0 %v448
    %v936 = vpop.f32.mrf.mxu0
    %v937 = vadd.f32 %v429, %v936
    %v938 = vpop.f32.mrf.mxu0
    %939 = vmatprep.mubr.f32.mxu0 0.0
    %940 = vmatmul.mubr.f32.gmra.mxu0 %v450
    %v941 = vpop.f32.mrf.mxu0
    %v942 = vadd.f32 %v433, %v941
    %v943 = vpop.f32.mrf.mxu0
    %944 = vdwg.mxu0
    %vm945 = vcmp.gt.f32.partialorder %v927, 0.0
    %vm946 = vcmp.gt.f32.partialorder %v932, 0.0
    %vm947 = vcmp.gt.f32.partialorder %v937, 0.0
    %vm948 = vcmp.gt.f32.partialorder %v942, 0.0
    %v949 = vmul.f32 %v927, 0.01
    %v950 = vmul.f32 %v932, 0.01
    %v951 = vmul.f32 %v937, 0.01
    %v952 = vmul.f32 %v942, 0.01
    %v953 = vsel %vm945, %v927, %v949
    %v954 = vsel %vm946, %v932, %v950
    %v955 = vsel %vm947, %v937, %v951
    %v956 = vsel %vm948, %v942, %v952
    %957 = vmatprep.subr.mxu0 0.0
    %958 = vmatpush1.msra.mxu0 0.0
    %959 = vmatprep.subr.mxu0 0.0
    %960 = vmatpush1.msra.mxu0 0.0
    %961 = vmatprep.subr.mxu0 0.0
    %962 = vmatpush1.msra.mxu0 0.0
    %963 = vmatprep.subr.mxu0 0.0
    %964 = vmatpush1.msra.mxu0 0.0
    %965 = vmatprep.subr.mxu0 0.0
    %966 = vmatpush1.msra.mxu0 0.0
    %967 = vmatprep.subr.mxu0 0.0
    %968 = vmatpush1.msra.mxu0 0.0
    %969 = vmatprep.subr.mxu0 0.0
    %970 = vmatpush1.msra.mxu0 0.0
    %971 = vmatprep.subr.mxu0 0.0
    %972 = vmatpush1.msra.mxu0 0.0
    %973 = vmatprep.subr.mxu0 0.0
    %974 = vmatpush1.msra.mxu0 0.0
    %975 = vmatprep.subr.mxu0 0.0
    %976 = vmatpush1.msra.mxu0 0.0
    %977 = vmatprep.subr.mxu0 0.0
    %978 = vmatpush1.msra.mxu0 0.0
    %979 = vmatprep.subr.mxu0 0.0
    %980 = vmatpush1.msra.mxu0 0.0
    %981 = vmatprep.subr.mxu0 0.0
    %982 = vmatpush1.msra.mxu0 %v956
    %983 = vmatprep.subr.mxu0 0.0
    %984 = vmatpush1.msra.mxu0 %v955
    %985 = vmatprep.subr.mxu0 0.0
    %986 = vmatpush1.msra.mxu0 %v954
    %987 = vmatprep.subr.mxu0 0.0
    %988 = vmatpush1.msra.mxu0 %v953
    %989 = vmatprep.subr.mxu0 0.0
    %990 = vmatpush2.msra.mxu0 0.0
    %991 = vmatprep.subr.mxu0 0.0
    %992 = vmatpush2.msra.mxu0 0.0
    %993 = vmatprep.subr.mxu0 0.0
    %994 = vmatpush2.msra.mxu0 0.0
    %995 = vmatprep.subr.mxu0 0.0
    %996 = vmatpush2.msra.mxu0 0.0
    %997 = vmatprep.subr.mxu0 0.0
    %998 = vmatpush2.msra.mxu0 0.0
    %999 = vmatprep.subr.mxu0 0.0
    %1000 = vmatpush2.msra.mxu0 0.0
    %1001 = vmatprep.subr.mxu0 0.0
    %1002 = vmatpush2.msra.mxu0 0.0
    %1003 = vmatprep.subr.mxu0 0.0
    %1004 = vmatpush2.msra.mxu0 0.0
    %1005 = vmatprep.subr.mxu0 0.0
    %1006 = vmatpush2.msra.mxu0 0.0
    %1007 = vmatprep.subr.mxu0 0.0
    %1008 = vmatpush2.msra.mxu0 0.0
    %1009 = vmatprep.subr.mxu0 0.0
    %1010 = vmatpush2.msra.mxu0 0.0
    %1011 = vmatprep.subr.mxu0 0.0
    %1012 = vmatpush2.msra.mxu0 0.0
    %1013 = vmatprep.subr.mxu0 0.0
    %1014 = vmatpush2.msra.mxu0 0.0
    %1015 = vmatprep.subr.mxu0 0.0
    %1016 = vmatpush2.msra.mxu0 0.0
    %1017 = vmatprep.subr.mxu0 0.0
    %1018 = vmatpush2.msra.mxu0 0.0
    %1019 = vmatprep.subr.mxu0 0.0
    %1020 = vmatpush2.msra.mxu0 0.0
    %1021 = vmatprep.mubr.f32.mxu0 0.0
    %1022 = vmatmul.mubr.f32.gmra.mxu0 %v554
    %v1023 = vpop.f32.mrf.mxu0
    %v1024 = vadd.f32 %v552, %v1023
    %v1025 = vpop.f32.mrf.mxu0
    %1026 = vdwg.mxu0
    %v1027 = vmul.f32 %v1024, %v53
    %v1028 = vsel %vm626, %v1027, 0.0
    %1029 = vadd.xlane.f32.xlu0 %v1028
    %v1030 = vpop.xlane.xlu0 %1029
    %v1031 = vmul.f32 %v1030, 0.071428575
    %v1032 = vsub.f32 %v1024, %v1031
    %v1033 = vmul.f32 %v1032, %v1032
    %v1034 = vmul.f32 %v1033, %v53
    %v1035 = vsel %vm626, %v1034, 0.0
    %1036 = vadd.xlane.f32.xlu0 %v1035
    %v1037 = vpop.xlane.xlu0 %1036
    %v1038 = vmul.f32 %v1037, 0.071428575
    %v1039 = vadd.f32 %v1038, 1e-05
    %v1040 = vrsqrt.pop %v1039
    %v1041 = vmul.f32 %v33, %v1040
    %1043 = vset.pattern.permute.xlu0 33
    %1044 = vperm.xlu0 %1043, %v1041
    %v1045 = vpop.permute.xlu0 %1044
    %v1047 = vmul.f32 %v1024, %v1045
    %v1048 = vmul.f32 %v1031, %v1041
    %1050 = vrot.lane.b32.xlu0 %v1048, 1
    %v1051 = vpop.permute.xlu0 %1050
    %v1053 = vsub.f32 %v33, %v1051
    %1055 = vset.pattern.permute.xlu0 34
    %1056 = vperm.xlu0 %1055, %v1053
    %v1057 = vpop.permute.xlu0 %1056
    %v1059 = vadd.f32 %v1047, %v1057
    %v1060 = vmul.f32 %v1059, %v53
    %v1061 = vadd.f32 %v658, %v859
    %v1062 = vadd.f32 %v1061, %v1060
    %1063 = vset.pattern.permute.xlu0 47
    %1064 = vperm.xlu0 %1063, %v29
    %v1065 = vpop.permute.xlu0 %1064
    %1067 = vset.pattern.permute.xlu0 47
    %1068 = vperm.xlu0 %1067, %v30
    %v1069 = vpop.permute.xlu0 %1068
    %1071 = vset.pattern.permute.xlu0 47
    %1072 = vperm.xlu0 %1071, %v31
    %v1073 = vpop.permute.xlu0 %1072
    %1075 = vset.pattern.permute.xlu0 47
    %1076 = vperm.xlu0 %1075, %v32
    %v1077 = vpop.permute.xlu0 %1076
    %1079 = vrot.lane.b32.xlu0 %v29, 85
    %v1080 = vpop.permute.xlu0 %1079
    %1081 = vrot.lane.b32.xlu0 %v30, 85
    %v1082 = vpop.permute.xlu0 %1081
    %1083 = vrot.lane.b32.xlu0 %v31, 85
    %v1084 = vpop.permute.xlu0 %1083
    %1085 = vrot.lane.b32.xlu0 %v32, 85
    %v1086 = vpop.permute.xlu0 %1085
    %v1087 = vsel %vm54, %v1080, 0
    %v1089 = vsel %vm54, %v1082, 0
    %v1091 = vsel %vm54, %v1084, 0
    %v1093 = vsel %vm54, %v1086, 0
    %v1096 = vsel %vm67, %v1062, 0
    %1098 = vmatprep.subr.mxu0 0.0
    %1099 = vmatpush1.msra.mxu0 0.0
    %1100 = vmatprep.subr.mxu0 0.0
    %1101 = vmatpush1.msra.mxu0 0.0
    %1102 = vmatprep.subr.mxu0 0.0
    %1103 = vmatpush1.msra.mxu0 0.0
    %1104 = vmatprep.subr.mxu0 0.0
    %1105 = vmatpush1.msra.mxu0 0.0
    %1106 = vmatprep.subr.mxu0 0.0
    %1107 = vmatpush1.msra.mxu0 0.0
    %1108 = vmatprep.subr.mxu0 0.0
    %1109 = vmatpush1.msra.mxu0 0.0
    %1110 = vmatprep.subr.mxu0 0.0
    %1111 = vmatpush1.msra.mxu0 0.0
    %1112 = vmatprep.subr.mxu0 0.0
    %1113 = vmatpush1.msra.mxu0 0.0
    %1114 = vmatprep.subr.mxu0 0.0
    %1115 = vmatpush1.msra.mxu0 0.0
    %1116 = vmatprep.subr.mxu0 0.0
    %1117 = vmatpush1.msra.mxu0 0.0
    %1118 = vmatprep.subr.mxu0 0.0
    %1119 = vmatpush1.msra.mxu0 0.0
    %1120 = vmatprep.subr.mxu0 0.0
    %1121 = vmatpush1.msra.mxu0 0.0
    %1122 = vmatprep.subr.mxu0 0.0
    %1123 = vmatpush1.msra.mxu0 0.0
    %1124 = vmatprep.subr.mxu0 0.0
    %1125 = vmatpush1.msra.mxu0 0.0
    %1126 = vmatprep.subr.mxu0 0.0
    %1127 = vmatpush1.msra.mxu0 0.0
    %1128 = vmatprep.subr.mxu0 0.0
    %1129 = vmatpush1.msra.mxu0 %v1096
    %1130 = vmatprep.subr.mxu0 0.0
    %1131 = vmatpush2.msra.mxu0 0.0
    %1132 = vmatprep.subr.mxu0 0.0
    %1133 = vmatpush2.msra.mxu0 0.0
    %1134 = vmatprep.subr.mxu0 0.0
    %1135 = vmatpush2.msra.mxu0 0.0
    %1136 = vmatprep.subr.mxu0 0.0
    %1137 = vmatpush2.msra.mxu0 0.0
    %1138 = vmatprep.subr.mxu0 0.0
    %1139 = vmatpush2.msra.mxu0 0.0
    %1140 = vmatprep.subr.mxu0 0.0
    %1141 = vmatpush2.msra.mxu0 0.0
    %1142 = vmatprep.subr.mxu0 0.0
    %1143 = vmatpush2.msra.mxu0 0.0
    %1144 = vmatprep.subr.mxu0 0.0
    %1145 = vmatpush2.msra.mxu0 0.0
    %1146 = vmatprep.subr.mxu0 0.0
    %1147 = vmatpush2.msra.mxu0 0.0
    %1148 = vmatprep.subr.mxu0 0.0
    %1149 = vmatpush2.msra.mxu0 0.0
    %1150 = vmatprep.subr.mxu0 0.0
    %1151 = vmatpush2.msra.mxu0 0.0
    %1152 = vmatprep.subr.mxu0 0.0
    %1153 = vmatpush2.msra.mxu0 0.0
    %1154 = vmatprep.subr.mxu0 0.0
    %1155 = vmatpush2.msra.mxu0 0.0
    %1156 = vmatprep.subr.mxu0 0.0
    %1157 = vmatpush2.msra.mxu0 0.0
    %1158 = vmatprep.subr.mxu0 0.0
    %1159 = vmatpush2.msra.mxu0 0.0
    %1160 = vmatprep.subr.mxu0 0.0
    %1161 = vmatpush2.msra.mxu0 0.0
    %1162 = vmatprep.mubr.f32.mxu0 0.0
    %1163 = vmatmul.mubr.f32.gmra.mxu0 %v1087
    %v1164 = vpop.f32.mrf.mxu0
    %v1165 = vadd.f32 %v1065, %v1164
    %v1166 = vpop.f32.mrf.mxu0
    %1167 = vmatprep.mubr.f32.mxu0 0.0
    %1168 = vmatmul.mubr.f32.gmra.mxu0 %v1089
    %v1169 = vpop.f32.mrf.mxu0
    %v1170 = vadd.f32 %v1069, %v1169
    %v1171 = vpop.f32.mrf.mxu0
    %1172 = vmatprep.mubr.f32.mxu0 0.0
    %1173 = vmatmul.mubr.f32.gmra.mxu0 %v1091
    %v1174 = vpop.f32.mrf.mxu0
    %v1175 = vadd.f32 %v1073, %v1174
    %v1176 = vpop.f32.mrf.mxu0
    %1177 = vmatprep.mubr.f32.mxu0 0.0
    %1178 = vmatmul.mubr.f32.gmra.mxu0 %v1093
    %v1179 = vpop.f32.mrf.mxu0
    %v1180 = vadd.f32 %v1077, %v1179
    %v1181 = vpop.f32.mrf.mxu0
    %1182 = vdwg.mxu0
    %vm1183 = vcmp.gt.f32.partialorder %v1165, 0.0
    %vm1184 = vcmp.gt.f32.partialorder %v1170, 0.0
    %vm1185 = vcmp.gt.f32.partialorder %v1175, 0.0
    %vm1186 = vcmp.gt.f32.partialorder %v1180, 0.0
    %v1187 = vmul.f32 %v1165, 0.01
    %v1188 = vmul.f32 %v1170, 0.01
    %v1189 = vmul.f32 %v1175, 0.01
    %v1190 = vmul.f32 %v1180, 0.01
    %v1191 = vsel %vm1183, %v1165, %v1187
    %v1192 = vsel %vm1184, %v1170, %v1188
    %v1193 = vsel %vm1185, %v1175, %v1189
    %v1194 = vsel %vm1186, %v1180, %v1190
    %1195 = vset.pattern.permute.xlu0 80
    %1196 = vperm.xlu0 %1195, %v29
    %v1197 = vpop.permute.xlu0 %1196
    %1199 = vset.pattern.permute.xlu0 80
    %1200 = vperm.xlu0 %1199, %v30
    %v1201 = vpop.permute.xlu0 %1200
    %1203 = vset.pattern.permute.xlu0 80
    %1204 = vperm.xlu0 %1203, %v31
    %v1205 = vpop.permute.xlu0 %1204
    %1207 = vset.pattern.permute.xlu0 80
    %1208 = vperm.xlu0 %1207, %v32
    %v1209 = vpop.permute.xlu0 %1208
    %1211 = vrot.lane.b32.xlu0 %v29, 80
    %v1212 = vpop.permute.xlu0 %1211
    %1213 = vrot.lane.b32.xlu0 %v30, 80
    %v1214 = vpop.permute.xlu0 %1213
    %1215 = vrot.lane.b32.xlu0 %v31, 80
    %v1216 = vpop.permute.xlu0 %1215
    %1217 = vrot.lane.b32.xlu0 %v32, 80
    %v1218 = vpop.permute.xlu0 %1217
    %v1219 = vsel %vm443, %v1212, 0
    %v1221 = vsel %vm443, %v1214, 0
    %v1223 = vsel %vm443, %v1216, 0
    %v1225 = vsel %vm443, %v1218, 0
    %1227 = vmatprep.subr.mxu0 0.0
    %1228 = vmatpush1.msra.mxu0 0.0
    %1229 = vmatprep.subr.mxu0 0.0
    %1230 = vmatpush1.msra.mxu0 0.0
    %1231 = vmatprep.subr.mxu0 0.0
    %1232 = vmatpush1.msra.mxu0 0.0
    %1233 = vmatprep.subr.mxu0 0.0
    %1234 = vmatpush1.msra.mxu0 0.0
    %1235 = vmatprep.subr.mxu0 0.0
    %1236 = vmatpush1.msra.mxu0 0.0
    %1237 = vmatprep.subr.mxu0 0.0
    %1238 = vmatpush1.msra.mxu0 0.0
    %1239 = vmatprep.subr.mxu0 0.0
    %1240 = vmatpush1.msra.mxu0 0.0
    %1241 = vmatprep.subr.mxu0 0.0
    %1242 = vmatpush1.msra.mxu0 0.0
    %1243 = vmatprep.subr.mxu0 0.0
    %1244 = vmatpush1.msra.mxu0 0.0
    %1245 = vmatprep.subr.mxu0 0.0
    %1246 = vmatpush1.msra.mxu0 0.0
    %1247 = vmatprep.subr.mxu0 0.0
    %1248 = vmatpush1.msra.mxu0 0.0
    %1249 = vmatprep.subr.mxu0 0.0
    %1250 = vmatpush1.msra.mxu0 0.0
    %1251 = vmatprep.subr.mxu0 0.0
    %1252 = vmatpush1.msra.mxu0 %v1194
    %1253 = vmatprep.subr.mxu0 0.0
    %1254 = vmatpush1.msra.mxu0 %v1193
    %1255 = vmatprep.subr.mxu0 0.0
    %1256 = vmatpush1.msra.mxu0 %v1192
    %1257 = vmatprep.subr.mxu0 0.0
    %1258 = vmatpush1.msra.mxu0 %v1191
    %1259 = vmatprep.subr.mxu0 0.0
    %1260 = vmatpush2.msra.mxu0 0.0
    %1261 = vmatprep.subr.mxu0 0.0
    %1262 = vmatpush2.msra.mxu0 0.0
    %1263 = vmatprep.subr.mxu0 0.0
    %1264 = vmatpush2.msra.mxu0 0.0
    %1265 = vmatprep.subr.mxu0 0.0
    %1266 = vmatpush2.msra.mxu0 0.0
    %1267 = vmatprep.subr.mxu0 0.0
    %1268 = vmatpush2.msra.mxu0 0.0
    %1269 = vmatprep.subr.mxu0 0.0
    %1270 = vmatpush2.msra.mxu0 0.0
    %1271 = vmatprep.subr.mxu0 0.0
    %1272 = vmatpush2.msra.mxu0 0.0
    %1273 = vmatprep.subr.mxu0 0.0
    %1274 = vmatpush2.msra.mxu0 0.0
    %1275 = vmatprep.subr.mxu0 0.0
    %1276 = vmatpush2.msra.mxu0 0.0
    %1277 = vmatprep.subr.mxu0 0.0
    %1278 = vmatpush2.msra.mxu0 0.0
    %1279 = vmatprep.subr.mxu0 0.0
    %1280 = vmatpush2.msra.mxu0 0.0
    %1281 = vmatprep.subr.mxu0 0.0
    %1282 = vmatpush2.msra.mxu0 0.0
    %1283 = vmatprep.subr.mxu0 0.0
    %1284 = vmatpush2.msra.mxu0 0.0
    %1285 = vmatprep.subr.mxu0 0.0
    %1286 = vmatpush2.msra.mxu0 0.0
    %1287 = vmatprep.subr.mxu0 0.0
    %1288 = vmatpush2.msra.mxu0 0.0
    %1289 = vmatprep.subr.mxu0 0.0
    %1290 = vmatpush2.msra.mxu0 0.0
    %1291 = vmatprep.mubr.f32.mxu0 0.0
    %1292 = vmatmul.mubr.f32.gmra.mxu0 %v1219
    %v1293 = vpop.f32.mrf.mxu0
    %v1294 = vadd.f32 %v1197, %v1293
    %v1295 = vpop.f32.mrf.mxu0
    %1296 = vmatprep.mubr.f32.mxu0 0.0
    %1297 = vmatmul.mubr.f32.gmra.mxu0 %v1221
    %v1298 = vpop.f32.mrf.mxu0
    %v1299 = vadd.f32 %v1201, %v1298
    %v1300 = vpop.f32.mrf.mxu0
    %1301 = vmatprep.mubr.f32.mxu0 0.0
    %1302 = vmatmul.mubr.f32.gmra.mxu0 %v1223
    %v1303 = vpop.f32.mrf.mxu0
    %v1304 = vadd.f32 %v1205, %v1303
    %v1305 = vpop.f32.mrf.mxu0
    %1306 = vmatprep.mubr.f32.mxu0 0.0
    %1307 = vmatmul.mubr.f32.gmra.mxu0 %v1225
    %v1308 = vpop.f32.mrf.mxu0
    %v1309 = vadd.f32 %v1209, %v1308
    %v1310 = vpop.f32.mrf.mxu0
    %1311 = vdwg.mxu0
    %vm1312 = vcmp.gt.f32.partialorder %v1294, 0.0
    %vm1313 = vcmp.gt.f32.partialorder %v1299, 0.0
    %vm1314 = vcmp.gt.f32.partialorder %v1304, 0.0
    %vm1315 = vcmp.gt.f32.partialorder %v1309, 0.0
    %v1316 = vmul.f32 %v1294, 0.01
    %v1317 = vmul.f32 %v1299, 0.01
    %v1318 = vmul.f32 %v1304, 0.01
    %v1319 = vmul.f32 %v1309, 0.01
    %v1320 = vsel %vm1312, %v1294, %v1316
    %v1321 = vsel %vm1313, %v1299, %v1317
    %v1322 = vsel %vm1314, %v1304, %v1318
    %v1323 = vsel %vm1315, %v1309, %v1319
    %1324 = vset.pattern.permute.xlu0 67
    %1325 = vperm.xlu0 %1324, %v33
    %v1326 = vpop.permute.xlu0 %1325
    %1328 = vrot.lane.b32.xlu0 %v33, 93
    %v1329 = vpop.permute.xlu0 %1328
    %v1330 = vsel %vm443, %v1329, 0
    %1332 = vmatprep.subr.mxu0 0.0
    %1333 = vmatpush1.msra.mxu0 0.0
    %1334 = vmatprep.subr.mxu0 0.0
    %1335 = vmatpush1.msra.mxu0 0.0
    %1336 = vmatprep.subr.mxu0 0.0
    %1337 = vmatpush1.msra.mxu0 0.0
    %1338 = vmatprep.subr.mxu0 0.0
    %1339 = vmatpush1.msra.mxu0 0.0
    %1340 = vmatprep.subr.mxu0 0.0
    %1341 = vmatpush1.msra.mxu0 0.0
    %1342 = vmatprep.subr.mxu0 0.0
    %1343 = vmatpush1.msra.mxu0 0.0
    %1344 = vmatprep.subr.mxu0 0.0
    %1345 = vmatpush1.msra.mxu0 0.0
    %1346 = vmatprep.subr.mxu0 0.0
    %1347 = vmatpush1.msra.mxu0 0.0
    %1348 = vmatprep.subr.mxu0 0.0
    %1349 = vmatpush1.msra.mxu0 0.0
    %1350 = vmatprep.subr.mxu0 0.0
    %1351 = vmatpush1.msra.mxu0 0.0
    %1352 = vmatprep.subr.mxu0 0.0
    %1353 = vmatpush1.msra.mxu0 0.0
    %1354 = vmatprep.subr.mxu0 0.0
    %1355 = vmatpush1.msra.mxu0 0.0
    %1356 = vmatprep.subr.mxu0 0.0
    %1357 = vmatpush1.msra.mxu0 %v1323
    %1358 = vmatprep.subr.mxu0 0.0
    %1359 = vmatpush1.msra.mxu0 %v1322
    %1360 = vmatprep.subr.mxu0 0.0
    %1361 = vmatpush1.msra.mxu0 %v1321
    %1362 = vmatprep.subr.mxu0 0.0
    %1363 = vmatpush1.msra.mxu0 %v1320
    %1364 = vmatprep.subr.mxu0 0.0
    %1365 = vmatpush2.msra.mxu0 0.0
    %1366 = vmatprep.subr.mxu0 0.0
    %1367 = vmatpush2.msra.mxu0 0.0
    %1368 = vmatprep.subr.mxu0 0.0
    %1369 = vmatpush2.msra.mxu0 0.0
    %1370 = vmatprep.subr.mxu0 0.0
    %1371 = vmatpush2.msra.mxu0 0.0
    %1372 = vmatprep.subr.mxu0 0.0
    %1373 = vmatpush2.msra.mxu0 0.0
    %1374 = vmatprep.subr.mxu0 0.0
    %1375 = vmatpush2.msra.mxu0 0.0
    %1376 = vmatprep.subr.mxu0 0.0
    %1377 = vmatpush2.msra.mxu0 0.0
    %1378 = vmatprep.subr.mxu0 0.0
    %1379 = vmatpush2.msra.mxu0 0.0
    %1380 = vmatprep.subr.mxu0 0.0
    %1381 = vmatpush2.msra.mxu0 0.0
    %1382 = vmatprep.subr.mxu0 0.0
    %1383 = vmatpush2.msra.mxu0 0.0
    %1384 = vmatprep.subr.mxu0 0.0
    %1385 = vmatpush2.msra.mxu0 0.0
    %1386 = vmatprep.subr.mxu0 0.0
    %1387 = vmatpush2.msra.mxu0 0.0
    %1388 = vmatprep.subr.mxu0 0.0
    %1389 = vmatpush2.msra.mxu0 0.0
    %1390 = vmatprep.subr.mxu0 0.0
    %1391 = vmatpush2.msra.mxu0 0.0
    %1392 = vmatprep.subr.mxu0 0.0
    %1393 = vmatpush2.msra.mxu0 0.0
    %1394 = vmatprep.subr.mxu0 0.0
    %1395 = vmatpush2.msra.mxu0 0.0
    %1396 = vmatprep.mubr.f32.mxu0 0.0
    %1397 = vmatmul.mubr.f32.gmra.mxu0 %v1330
    %v1398 = vpop.f32.mrf.mxu0
    %v1399 = vadd.f32 %v1326, %v1398
    %v1400 = vpop.f32.mrf.mxu0
    %1401 = vdwg.mxu0
    %v1402 = vsel %vm626, %v1399, 0.0
    %1403 = vadd.xlane.f32.xlu0 %v1402
    %v1404 = vpop.xlane.xlu0 %1403
    %v1405 = vmul.f32 %v1404, %v630
    %v1406 = vsub.f32 %v1399, %v1405
    %v1407 = vmul.f32 %v1406, %v1406
    %v1408 = vsel %vm626, %v1407, 0.0
    %1409 = vadd.xlane.f32.xlu0 %v1408
    %v1410 = vpop.xlane.xlu0 %1409
    %v1411 = vmul.f32 %v1410, %v630
    %v1412 = vadd.f32 %v1411, 1e-05
    %v1413 = vrsqrt.pop %v1412
    %v1414 = vmul.f32 %v33, %v1413
    %1416 = vset.pattern.permute.xlu0 68
    %1417 = vperm.xlu0 %1416, %v1414
    %v1418 = vpop.permute.xlu0 %1417
    %v1420 = vmul.f32 %v1399, %v1418
    %v1421 = vmul.f32 %v1405, %v1414
    %1423 = vrot.lane.b32.xlu0 %v1421, 1
    %v1424 = vpop.permute.xlu0 %1423
    %v1426 = vsub.f32 %v33, %v1424
    %1428 = vset.pattern.permute.xlu0 69
    %1429 = vperm.xlu0 %1428, %v1426
    %v1430 = vpop.permute.xlu0 %1429
    %v1432 = vadd.f32 %v1420, %v1430
    %1433 = vst.msk [vmem:[%s3] sm:$0xf] %vm626, %v1432
    // Predicated region
    $region18: #{_lambda_.1} parent=1 // pred_check
      _
    $region19: #{_lambda_.1} parent=1 // pred_check_branch
      %1435 = sbr.rel (0) target = $region21
    $region20: #{_lambda_.1} parent=1 // pred_region
      _
    $region21: #{_lambda_.1} parent=1 // pred_fallthru
      _
    // Predicated region
    $region22: #{_lambda_.1} parent=1 // pred_check
      _
    $region23: #{_lambda_.1} parent=1 // pred_check_branch
      %1437 = sbr.rel (0) target = $region25
    $region24: #{_lambda_.1} parent=1 // pred_region
      _
    $region25: #{_lambda_.1} parent=1 // pred_fallthru
      _
    %1438 = vsyncpa [#allocation3], 1

</llo_original>
